<compile_context>
chip_gen: v6e
topology: v6e:2x2x1
jax: 0.10.0
libtpu: 0.0.40
codegen_flags: <defaults>
</compile_context>

<pallas_src>
import functools

import jax
import jax.numpy as jnp
from jax.experimental import pallas as pl
from jax.experimental.pallas import tpu as pltpu

LANE = 128      # TPU lane width (last-dim tiling unit)
SUBLANE = 8     # f32 sublane count (second-to-last-dim tiling unit)


def _cdiv(a, b):
    return -(-a // b)


def _round_up(n, m):
    return _cdiv(n, m) * m


def _vae_kernel(f, f_pad, train,
                x_ref, eps_ref,
                w1_ref, b1_ref, w2_ref, b2_ref,
                w3_ref, b3_ref, w4_ref, b4_ref,
                xhat_ref, enc_ref):
    """Fused encoder -> reparameterize -> decoder for one batch tile."""
    bf16 = jnp.bfloat16

    # x arrives in f32; cast to bf16 right before the MXU (VPU cast hides under matmul).
    x = x_ref[...].astype(bf16)                                        # (TB, D)

    # ---- Encoder: Linear -> ReLU -> Linear (bf16 MXU, f32 accumulation) ----
    h = jnp.dot(x, w1_ref[...], preferred_element_type=jnp.float32) + b1_ref[...]
    h = jnp.maximum(h, 0.0).astype(bf16)
    enc = jnp.dot(h, w2_ref[...], preferred_element_type=jnp.float32) + b2_ref[...]

    # Packed lane-dense encoder output: mu in lanes [0,Fp), log_var in [Fp,2Fp).
    enc_ref[...] = enc

    mu = enc[:, :f_pad]
    log_var = enc[:, f_pad:]

    # ---- Reparameterize: z = mu + eps * exp(0.5*log_var) (train) / z = mu (eval) ----
    if train:
        eps = eps_ref[...]                                             # (TB, F) f32
        if f < f_pad:
            # Zero-extend eps to the lane-padded width (padded lanes of z are dead:
            # the corresponding rows of w3 are zero).
            eps = jnp.concatenate(
                [eps, jnp.zeros((eps.shape[0], f_pad - f), eps.dtype)], axis=-1)
        std = jnp.exp(0.5 * log_var)
        z = mu + eps * std
    else:
        z = mu
    z = z.astype(bf16)

    # ---- Decoder: Linear -> ReLU -> Linear -> Sigmoid ----
    d = jnp.dot(z, w3_ref[...], preferred_element_type=jnp.float32) + b3_ref[...]
    d = jnp.maximum(d, 0.0).astype(bf16)
    logits = jnp.dot(d, w4_ref[...], preferred_element_type=jnp.float32) + b4_ref[...]

    xhat_ref[...] = jax.nn.sigmoid(logits).astype(xhat_ref.dtype)


def prepare_vae_params(params, features):
    """One-time weight re-layout (hoisted out of the per-call path).

    params: (w1, b1, w2, b2, w3, b3, w4, b4) float32, with
      w1: (D, H), w2: (H, 2F), w3: (F, H), w4: (H, D)  [x @ W convention]
    Returns bf16 weights / f32 biases with mu columns in lanes [0,Fp) and
    log_var columns in lanes [Fp,2Fp), w3 rows zero-padded to Fp.
    """
    w1, b1, w2, b2, w3, b3, w4, b4 = params
    bf, f32 = jnp.bfloat16, jnp.float32
    D, H = w1.shape
    F = features
    Fp = _round_up(F, LANE)

    w1b = w1.astype(bf)
    b1f = b1.reshape(1, H).astype(f32)

    w2b = jnp.zeros((H, 2 * Fp), bf)
    w2b = w2b.at[:, :F].set(w2[:, :F].astype(bf))
    w2b = w2b.at[:, Fp:Fp + F].set(w2[:, F:].astype(bf))
    b2v = b2.reshape(-1)
    b2f = jnp.zeros((1, 2 * Fp), f32)
    b2f = b2f.at[0, :F].set(b2v[:F].astype(f32))
    b2f = b2f.at[0, Fp:Fp + F].set(b2v[F:].astype(f32))

    w3b = jnp.zeros((Fp, H), bf).at[:F].set(w3.astype(bf))
    b3f = b3.reshape(1, H).astype(f32)

    w4b = w4.astype(bf)
    b4f = b4.reshape(1, D).astype(f32)

    return (w1b, b1f, w2b, b2f, w3b, b3f, w4b, b4f)


def vae_forward(x_nchw, eps, prepped, *, features, mode="train",
                block_b=512, xhat_dtype=jnp.bfloat16):
    """Fused VAE forward. Returns (x_hat, mu, log_var).

    x_nchw:  [B, C, H, W] float32
    eps:     [B, features] float32 (the randn_like noise); ignored when mode != 'train'
    prepped: output of prepare_vae_params(...)
    """
    w1b, b1f, w2b, b2f, w3b, b3f, w4b, b4f = prepped
    B = x_nchw.shape[0]
    x = x_nchw.reshape(B, -1).astype(jnp.float32)          # same as torch .view(B, -1)
    D, H = w1b.shape
    F = features
    Fp = w2b.shape[1] // 2
    assert x.shape[1] == D, "input feature size mismatch with encoder weights"

    train = (mode == "train")
    if eps is None or not train:
        eps = jnp.zeros((B, F), jnp.float32)
    eps = eps.astype(jnp.float32)

    # Batch tile: multiple of the f32 sublane; aim for >=2 programs so v7x's two
    # TensorCores both get work; capped at block_b (256-512 feeds v6e's 256-wide MXU).
    TB = min(block_b, max(SUBLANE, _round_up(_cdiv(B, 2), SUBLANE)))
    grid = (_cdiv(B, TB),)                                 # partial last block is masked

    kernel = functools.partial(_vae_kernel, F, Fp, train)

    def batch_spec(n):
        return pl.BlockSpec((TB, n), lambda i: (i, 0))

    def const_spec(shape):
        return pl.BlockSpec(shape, lambda i: (0, 0))

    out_shapes = (
        jax.ShapeDtypeStruct((B, D), xhat_dtype),          # x_hat (bf16 by default)
        jax.ShapeDtypeStruct((B, 2 * Fp), jnp.float32),    # packed [mu | log_var]
    )

    flops = 2 * B * (D * H + H * 2 * Fp + Fp * H + H * D)
    transcendentals = B * (Fp + 2 * D)                     # exp(std) + sigmoid(exp+recip)
    bytes_accessed = (
        2 * (D * H + H * 2 * Fp + Fp * H + H * D)          # bf16 weights
        + 4 * (2 * H + 2 * Fp + D)                         # f32 biases
        + 4 * B * (D + F)                                  # f32 x + eps
        + jnp.dtype(xhat_dtype).itemsize * B * D           # x_hat
        + 4 * B * 2 * Fp                                   # enc (mu|log_var)
    )

    x_hat, enc = pl.pallas_call(
        kernel,
        out_shape=out_shapes,
        grid=grid,
        in_specs=[
            batch_spec(D),                                       # x tile (f32)
            batch_spec(F),                                       # eps tile (f32)
            const_spec((D, H)), const_spec((1, H)),              # encoder layer 1
            const_spec((H, 2 * Fp)), const_spec((1, 2 * Fp)),    # encoder layer 2
            const_spec((Fp, H)), const_spec((1, H)),             # decoder layer 1
            const_spec((H, D)), const_spec((1, D)),              # decoder layer 2
        ],
        out_specs=(
            batch_spec(D),
            batch_spec(2 * Fp),
        ),
        compiler_params=pltpu.CompilerParams(
            dimension_semantics=("parallel",),
            vmem_limit_bytes=32 * 1024 * 1024,
        ),
        cost_estimate=pl.CostEstimate(
            flops=flops,
            transcendentals=transcendentals,
            bytes_accessed=int(bytes_accessed),
        ),
    )(x, eps, w1b, b1f, w2b, b2f, w3b, b3f, w4b, b4f)

    mu = enc[:, :F]
    log_var = enc[:, Fp:Fp + F]
    return x_hat, mu, log_var


def _init_params(key, in_dim, hidden, features):
    """Deterministic small-scale parameter init (synthetic, not a checkpoint)."""
    ks = jax.random.split(key, 8)
    scale = 0.05
    w1 = scale * jax.random.normal(ks[0], (in_dim, hidden), jnp.float32)
    b1 = scale * jax.random.normal(ks[1], (1, hidden), jnp.float32)
    w2 = scale * jax.random.normal(ks[2], (hidden, 2 * features), jnp.float32)
    b2 = scale * jax.random.normal(ks[3], (1, 2 * features), jnp.float32)
    w3 = scale * jax.random.normal(ks[4], (features, hidden), jnp.float32)
    b3 = scale * jax.random.normal(ks[5], (1, hidden), jnp.float32)
    w4 = scale * jax.random.normal(ks[6], (hidden, in_dim), jnp.float32)
    b4 = scale * jax.random.normal(ks[7], (1, in_dim), jnp.float32)
    return (w1, b1, w2, b2, w3, b3, w4, b4)


if __name__ == "__main__":
    key = jax.random.PRNGKey(0)
    k_x, k_eps, k_p = jax.random.split(key, 3)

    B, C, Hs, Ws = 2, 4, 16, 16           # small NCHW input, as in PyTorch
    FEATURES = 32                          # Config.features
    HIDDEN = 128
    IN_DIM = C * Hs * Ws

    x = jax.random.normal(k_x, (B, C, Hs, Ws), jnp.float32)
    eps = jax.random.normal(k_eps, (B, FEATURES), jnp.float32)   # randn_like(std)
    params = _init_params(k_p, IN_DIM, HIDDEN, FEATURES)

    # One-time weight layout (hoisted out of the per-call path).
    prepped = prepare_vae_params(params, FEATURES)

    fwd = jax.jit(functools.partial(vae_forward, features=FEATURES, mode="train"))
    x_hat, mu, log_var = fwd(x, eps, prepped)
    jax.block_until_ready((x_hat, mu, log_var))

    # Reference in plain JAX, mimicking the kernel's bf16-weight / f32-accumulate math.
    bf, f32 = jnp.bfloat16, jnp.float32
    xf = x.reshape(B, -1).astype(bf).astype(f32)
    w1, b1, w2, b2, w3, b3, w4, b4 = params
    w1f, w2f, w3f, w4f = (w.astype(bf).astype(f32) for w in (w1, w2, w3, w4))
    h = jnp.maximum(xf @ w1f + b1, 0.0).astype(bf).astype(f32)
    enc_r = h @ w2f + b2
    mu_r, lv_r = enc_r[:, :FEATURES], enc_r[:, FEATURES:]
    z = (mu_r + eps * jnp.exp(0.5 * lv_r)).astype(bf).astype(f32)
    d = jnp.maximum(z @ w3f + b3, 0.0).astype(bf).astype(f32)
    xhat_r = jax.nn.sigmoid(d @ w4f + b4)

    assert jnp.allclose(x_hat.astype(f32), xhat_r, atol=2e-2, rtol=2e-2), "x_hat mismatch"
    assert jnp.allclose(mu, mu_r, atol=2e-2, rtol=2e-2), "mu mismatch"
    assert jnp.allclose(log_var, lv_r, atol=2e-2, rtol=2e-2), "log_var mismatch"

    # TODO(synk): torch.randn_like is not generated in-kernel; eps is an explicit input
    # (pltpu.prng_random_bits could generate it on-chip if exact noise match is not needed).

    print("KERNEL_OK")
</pallas_src>

<mosaic_0001>
module attributes {stable_mosaic.version = 11 : i64} {
  func.func @_vae_kernel(%arg0: i32, %arg1: memref<8x1024xf32, #tpu.memory_space<vmem>>, %arg2: memref<8x32xf32, #tpu.memory_space<vmem>>, %arg3: memref<1024x128xbf16, #tpu.memory_space<vmem>>, %arg4: memref<1x128xf32, #tpu.memory_space<vmem>>, %arg5: memref<128x256xbf16, #tpu.memory_space<vmem>>, %arg6: memref<1x256xf32, #tpu.memory_space<vmem>>, %arg7: memref<128x128xbf16, #tpu.memory_space<vmem>>, %arg8: memref<1x128xf32, #tpu.memory_space<vmem>>, %arg9: memref<128x1024xbf16, #tpu.memory_space<vmem>>, %arg10: memref<1x1024xf32, #tpu.memory_space<vmem>>, %arg11: memref<8x1024xbf16, #tpu.memory_space<vmem>>, %arg12: memref<8x256xf32, #tpu.memory_space<vmem>>) attributes {dimension_semantics = [#tpu.dimension_semantics<parallel>], iteration_bounds = array<i64: 1>, scalar_prefetch = 0 : i64, scratch_operands = 0 : i64, tpu.core_type = #tpu.core_type<tc>, window_params = [{transform_indices = @transform_0, window_bounds = array<i64: 8, 1024>}, {transform_indices = @transform_1, window_bounds = array<i64: 8, 32>}, {pipeline_mode = #tpu.pipeline_mode<synchronous>, transform_indices = @transform_2, window_bounds = array<i64: 1024, 128>}, {pipeline_mode = #tpu.pipeline_mode<synchronous>, transform_indices = @transform_3, window_bounds = array<i64: 1, 128>}, {pipeline_mode = #tpu.pipeline_mode<synchronous>, transform_indices = @transform_4, window_bounds = array<i64: 128, 256>}, {pipeline_mode = #tpu.pipeline_mode<synchronous>, transform_indices = @transform_5, window_bounds = array<i64: 1, 256>}, {pipeline_mode = #tpu.pipeline_mode<synchronous>, transform_indices = @transform_6, window_bounds = array<i64: 128, 128>}, {pipeline_mode = #tpu.pipeline_mode<synchronous>, transform_indices = @transform_7, window_bounds = array<i64: 1, 128>}, {pipeline_mode = #tpu.pipeline_mode<synchronous>, transform_indices = @transform_8, window_bounds = array<i64: 128, 1024>}, {pipeline_mode = #tpu.pipeline_mode<synchronous>, transform_indices = @transform_9, window_bounds = array<i64: 1, 1024>}, {transform_indices = @transform_10, window_bounds = array<i64: 8, 1024>}, {transform_indices = @transform_11, window_bounds = array<i64: 8, 256>}]} {
    %c0 = arith.constant 0 : index
    %c0_0 = arith.constant 0 : index
    %0 = vector.load %arg1[%c0, %c0_0] : memref<8x1024xf32, #tpu.memory_space<vmem>>, vector<8x1024xf32>
    %1 = arith.truncf %0 : vector<8x1024xf32> to vector<8x1024xbf16>
    %c0_1 = arith.constant 0 : index
    %c0_2 = arith.constant 0 : index
    %2 = vector.load %arg3[%c0_1, %c0_2] : memref<1024x128xbf16, #tpu.memory_space<vmem>>, vector<1024x128xbf16>
    %cst = arith.constant dense<0.000000e+00> : vector<8x128xf32>
    %3 = tpu.matmul %1, %2, %cst {dimension_numbers = #tpu.dot_dimension_numbers<[1], [0], [0], [1], [0, 0, 1, 1], [], []>} : vector<8x1024xbf16>, vector<1024x128xbf16>, vector<8x128xf32> -> vector<8x128xf32>
    %c0_3 = arith.constant 0 : index
    %c0_4 = arith.constant 0 : index
    %4 = vector.load %arg4[%c0_3, %c0_4] : memref<1x128xf32, #tpu.memory_space<vmem>>, vector<1x128xf32>
    %5 = vector.broadcast %4 : vector<1x128xf32> to vector<8x128xf32>
    %6 = arith.addf %3, %5 : vector<8x128xf32>
    %cst_5 = arith.constant 0.000000e+00 : f32
    %7 = vector.broadcast %cst_5 : f32 to vector<8x128xf32>
    %8 = arith.maximumf %6, %7 : vector<8x128xf32>
    %9 = arith.truncf %8 : vector<8x128xf32> to vector<8x128xbf16>
    %c0_6 = arith.constant 0 : index
    %c0_7 = arith.constant 0 : index
    %10 = vector.load %arg5[%c0_6, %c0_7] : memref<128x256xbf16, #tpu.memory_space<vmem>>, vector<128x256xbf16>
    %cst_8 = arith.constant dense<0.000000e+00> : vector<8x256xf32>
    %11 = tpu.matmul %9, %10, %cst_8 {dimension_numbers = #tpu.dot_dimension_numbers<[1], [0], [0], [1], [0, 0, 1, 1], [], []>} : vector<8x128xbf16>, vector<128x256xbf16>, vector<8x256xf32> -> vector<8x256xf32>
    %c0_9 = arith.constant 0 : index
    %c0_10 = arith.constant 0 : index
    %12 = vector.load %arg6[%c0_9, %c0_10] : memref<1x256xf32, #tpu.memory_space<vmem>>, vector<1x256xf32>
    %13 = vector.broadcast %12 : vector<1x256xf32> to vector<8x256xf32>
    %14 = arith.addf %11, %13 : vector<8x256xf32>
    %c0_11 = arith.constant 0 : index
    %c0_12 = arith.constant 0 : index
    %15 = vector.load %arg12[%c0_11, %c0_12] : memref<8x256xf32, #tpu.memory_space<vmem>>, vector<8x256xf32>
    tpu.vector_store %arg12[%c0_11, %c0_12], %14 {strides = array<i32>} : memref<8x256xf32, #tpu.memory_space<vmem>>, vector<8x256xf32>,
    %16 = vector.extract_strided_slice %14 {offsets = [0, 0], sizes = [8, 128], strides = [1, 1]} : vector<8x256xf32> to vector<8x128xf32>
    %17 = vector.extract_strided_slice %14 {offsets = [0, 128], sizes = [8, 128], strides = [1, 1]} : vector<8x256xf32> to vector<8x128xf32>
    %c0_13 = arith.constant 0 : index
    %c0_14 = arith.constant 0 : index
    %18 = vector.load %arg2[%c0_13, %c0_14] : memref<8x32xf32, #tpu.memory_space<vmem>>, vector<8x32xf32>
    %cst_15 = arith.constant 0.000000e+00 : f32
    %19 = vector.broadcast %cst_15 : f32 to vector<8x96xf32>
    %20 = tpu.concatenate %18, %19 in 1 : vector<8x32xf32>, vector<8x96xf32> -> vector<8x128xf32>
    %cst_16 = arith.constant 5.000000e-01 : f32
    %21 = vector.broadcast %cst_16 : f32 to vector<8x128xf32>
    %22 = arith.mulf %21, %17 : vector<8x128xf32>
    %23 = math.exp %22 : vector<8x128xf32>
    %24 = arith.mulf %20, %23 : vector<8x128xf32>
    %25 = arith.addf %16, %24 : vector<8x128xf32>
    %26 = arith.truncf %25 : vector<8x128xf32> to vector<8x128xbf16>
    %c0_17 = arith.constant 0 : index
    %c0_18 = arith.constant 0 : index
    %27 = vector.load %arg7[%c0_17, %c0_18] : memref<128x128xbf16, #tpu.memory_space<vmem>>, vector<128x128xbf16>
    %cst_19 = arith.constant dense<0.000000e+00> : vector<8x128xf32>
    %28 = tpu.matmul %26, %27, %cst_19 {dimension_numbers = #tpu.dot_dimension_numbers<[1], [0], [0], [1], [0, 0, 1, 1], [], []>} : vector<8x128xbf16>, vector<128x128xbf16>, vector<8x128xf32> -> vector<8x128xf32>
    %c0_20 = arith.constant 0 : index
    %c0_21 = arith.constant 0 : index
    %29 = vector.load %arg8[%c0_20, %c0_21] : memref<1x128xf32, #tpu.memory_space<vmem>>, vector<1x128xf32>
    %30 = vector.broadcast %29 : vector<1x128xf32> to vector<8x128xf32>
    %31 = arith.addf %28, %30 : vector<8x128xf32>
    %cst_22 = arith.constant 0.000000e+00 : f32
    %32 = vector.broadcast %cst_22 : f32 to vector<8x128xf32>
    %33 = arith.maximumf %31, %32 : vector<8x128xf32>
    %34 = arith.truncf %33 : vector<8x128xf32> to vector<8x128xbf16>
    %c0_23 = arith.constant 0 : index
    %c0_24 = arith.constant 0 : index
    %35 = vector.load %arg9[%c0_23, %c0_24] : memref<128x1024xbf16, #tpu.memory_space<vmem>>, vector<128x1024xbf16>
    %cst_25 = arith.constant dense<0.000000e+00> : vector<8x1024xf32>
    %36 = tpu.matmul %34, %35, %cst_25 {dimension_numbers = #tpu.dot_dimension_numbers<[1], [0], [0], [1], [0, 0, 1, 1], [], []>} : vector<8x128xbf16>, vector<128x1024xbf16>, vector<8x1024xf32> -> vector<8x1024xf32>
    %c0_26 = arith.constant 0 : index
    %c0_27 = arith.constant 0 : index
    %37 = vector.load %arg10[%c0_26, %c0_27] : memref<1x1024xf32, #tpu.memory_space<vmem>>, vector<1x1024xf32>
    %38 = vector.broadcast %37 : vector<1x1024xf32> to vector<8x1024xf32>
    %39 = arith.addf %36, %38 : vector<8x1024xf32>
    %40 = arith.negf %39 : vector<8x1024xf32>
    %41 = math.exp %40 : vector<8x1024xf32>
    %cst_28 = arith.constant 1.000000e+00 : f32
    %42 = vector.broadcast %cst_28 : f32 to vector<8x1024xf32>
    %43 = arith.addf %42, %41 : vector<8x1024xf32>
    %44 = arith.divf %42, %43 : vector<8x1024xf32>
    %45 = arith.truncf %44 : vector<8x1024xf32> to vector<8x1024xbf16>
    %c0_29 = arith.constant 0 : index
    %c0_30 = arith.constant 0 : index
    %46 = vector.load %arg11[%c0_29, %c0_30] : memref<8x1024xbf16, #tpu.memory_space<vmem>>, vector<8x1024xbf16>
    tpu.vector_store %arg11[%c0_29, %c0_30], %45 {strides = array<i32>} : memref<8x1024xbf16, #tpu.memory_space<vmem>>, vector<8x1024xbf16>,
    return
  }
  func.func @transform_0(%arg0: i32) -> (i32, i32) {
    %c0_i32 = arith.constant 0 : i32
    %c0_i32_0 = arith.constant 0 : i32
    return %arg0, %c0_i32 : i32, i32
  }
  func.func @transform_1(%arg0: i32) -> (i32, i32) {
    %c0_i32 = arith.constant 0 : i32
    %c0_i32_0 = arith.constant 0 : i32
    return %arg0, %c0_i32 : i32, i32
  }
  func.func @transform_2(%arg0: i32) -> (i32, i32) {
    %c0_i32 = arith.constant 0 : i32
    %c0_i32_0 = arith.constant 0 : i32
    %c0_i32_1 = arith.constant 0 : i32
    return %c0_i32, %c0_i32_0 : i32, i32
  }
  func.func @transform_3(%arg0: i32) -> (i32, i32) {
    %c0_i32 = arith.constant 0 : i32
    %c0_i32_0 = arith.constant 0 : i32
    %c0_i32_1 = arith.constant 0 : i32
    return %c0_i32, %c0_i32_0 : i32, i32
  }
  func.func @transform_4(%arg0: i32) -> (i32, i32) {
    %c0_i32 = arith.constant 0 : i32
    %c0_i32_0 = arith.constant 0 : i32
    %c0_i32_1 = arith.constant 0 : i32
    return %c0_i32, %c0_i32_0 : i32, i32
  }
  func.func @transform_5(%arg0: i32) -> (i32, i32) {
    %c0_i32 = arith.constant 0 : i32
    %c0_i32_0 = arith.constant 0 : i32
    %c0_i32_1 = arith.constant 0 : i32
    return %c0_i32, %c0_i32_0 : i32, i32
  }
  func.func @transform_6(%arg0: i32) -> (i32, i32) {
    %c0_i32 = arith.constant 0 : i32
    %c0_i32_0 = arith.constant 0 : i32
    %c0_i32_1 = arith.constant 0 : i32
    return %c0_i32, %c0_i32_0 : i32, i32
  }
  func.func @transform_7(%arg0: i32) -> (i32, i32) {
    %c0_i32 = arith.constant 0 : i32
    %c0_i32_0 = arith.constant 0 : i32
    %c0_i32_1 = arith.constant 0 : i32
    return %c0_i32, %c0_i32_0 : i32, i32
  }
  func.func @transform_8(%arg0: i32) -> (i32, i32) {
    %c0_i32 = arith.constant 0 : i32
    %c0_i32_0 = arith.constant 0 : i32
    %c0_i32_1 = arith.constant 0 : i32
    return %c0_i32, %c0_i32_0 : i32, i32
  }
  func.func @transform_9(%arg0: i32) -> (i32, i32) {
    %c0_i32 = arith.constant 0 : i32
    %c0_i32_0 = arith.constant 0 : i32
    %c0_i32_1 = arith.constant 0 : i32
    return %c0_i32, %c0_i32_0 : i32, i32
  }
  func.func @transform_10(%arg0: i32) -> (i32, i32) {
    %c0_i32 = arith.constant 0 : i32
    %c0_i32_0 = arith.constant 0 : i32
    return %arg0, %c0_i32 : i32, i32
  }
  func.func @transform_11(%arg0: i32) -> (i32, i32) {
    %c0_i32 = arith.constant 0 : i32
    %c0_i32_0 = arith.constant 0 : i32
    return %arg0, %c0_i32 : i32, i32
  }
}

</mosaic_0001>

<llo_original>
// kernel: vae_forward.1
$region0: #{vae_forward.1}
  #allocation0 [shape = 'u32[]', space=smem, size = 0x4, offset = 0x4, fixed_abs, tag = 'smem constant byte address 0x4 - core index']
  #allocation1 [shape = 'u32[144,128]{1,0:T(1,128)}', space=vmem, size = 0x12000, scoped, tag = 'internal scratch']
  %s0 = inlined_call_operand.vmem [shape: f32[2,1024], index: 0, kind: input, shape index: {}]
  %s1 = inlined_call_operand.vmem [shape: f32[2,32], index: 1, kind: input, shape index: {}]
  %s2 = inlined_call_operand.hbm [shape: bf16[1024,128], index: 2, kind: input, shape index: {}]
  %s3 = inlined_call_operand.vmem [shape: f32[1,128], index: 3, kind: input, shape index: {}]
  %s4 = inlined_call_operand.vmem [shape: bf16[128,256], index: 4, kind: input, shape index: {}]
  %s5 = inlined_call_operand.vmem [shape: f32[1,256], index: 5, kind: input, shape index: {}]
  %s6 = inlined_call_operand.hbm [shape: bf16[128,128], index: 6, kind: input, shape index: {}]
  %s7 = inlined_call_operand.vmem [shape: f32[1,128], index: 7, kind: input, shape index: {}]
  %s8 = inlined_call_operand.hbm [shape: bf16[128,1024], index: 8, kind: input, shape index: {}]
  %s9 = inlined_call_operand.vmem [shape: f32[1,1024], index: 9, kind: input, shape index: {}]
  %s10 = inlined_call_operand.hbm [shape: bf16[2,1024], index: 10, kind: output, shape index: {0}]
  %s11 = inlined_call_operand.vmem [shape: f32[2,256], index: 11, kind: output, shape index: {1}]
  %12 = xla_tuple %s10, %s11
  %s13 = sld [smem:[#allocation0]]
  $region100: #{vae_forward.1} parent=0
    _
  %s15 = ssub.s32 1, %s13
  %s16 = scalar_select 0, %s15, %s13
  $region1: #{vae_forward.1} parent=0
    #allocation2 [shape = 'u8[262144]{0}', space=vmem, size = 0x40000, scoped, tag = 'input window, operand 2, single buffered']
    #allocation3 [shape = 's32[1]{0}', space=sflag, size = 0x4, scoped, tag = 'scoped memory for vae_forward.1']
    #allocation4 [shape = 's32[1]{0}', space=sflag, size = 0x4, scoped, tag = 'scoped memory for vae_forward.1']
    #allocation5 [shape = 'u8[32768]{0}', space=vmem, size = 0x8000, scoped, tag = 'input window, operand 6, single buffered']
    #allocation6 [shape = 's32[1]{0}', space=sflag, size = 0x4, scoped, tag = 'scoped memory for vae_forward.1']
    #allocation7 [shape = 'u8[262144]{0}', space=vmem, size = 0x40000, scoped, tag = 'input window, operand 8, single buffered']
    #allocation8 [shape = 'u8[16384]{0}', space=vmem, size = 0x4000, scoped, tag = 'output window, operand 0, single buffered']
    #allocation9 [shape = 'u8[8192]{0}', space=vmem, size = 0x2000, scoped, tag = 'output window, operand 1, single buffered']
    %17 = vsyncpa [#allocation3], 0
    %18 = vsyncpa [#allocation6], 0
    %19 = vsyncpa [#allocation4], 0
    // Predicated region
    $region2: #{vae_forward.1} parent=1 // pred_check
      _
    $region3: #{vae_forward.1} parent=1 // pred_check_branch
      %21 = sbr.rel (0) target = $region5
    $region4: #{vae_forward.1} parent=1 // pred_region
      _
    $region5: #{vae_forward.1} parent=1 // pred_fallthru
      _
    // Predicated region
    $region6: #{vae_forward.1} parent=1 // pred_check
      _
    $region7: #{vae_forward.1} parent=1 // pred_check_branch
      %23 = sbr.rel (0) target = $region9
    $region8: #{vae_forward.1} parent=1 // pred_region
      _
    $region9: #{vae_forward.1} parent=1 // pred_fallthru
      _
    // Predicated region
    $region10: #{vae_forward.1} parent=1 // pred_check
      _
    $region11: #{vae_forward.1} parent=1 // pred_check_branch
      %25 = sbr.rel (0) target = $region13
    $region12: #{vae_forward.1} parent=1 // pred_region
      %s27 = ssub.s32 8192, 8192
      %28 = vsyncadd [#allocation3], %s27
      %s29 = sshll.u32 [#allocation2], 4
      %s30 = int_to_ptr.vmem [resolvable:$true] %s29
      %35 = dma.hbm_to_vmem [thread:$0]  %s2, 8192, %s30, [#allocation3], 64, 64, 4
    $region13: #{vae_forward.1} parent=1 // pred_fallthru
      _
    // Predicated region
    $region14: #{vae_forward.1} parent=1 // pred_check
      _
    $region15: #{vae_forward.1} parent=1 // pred_check_branch
      %37 = sbr.rel (0) target = $region17
    $region16: #{vae_forward.1} parent=1 // pred_region
      _
    $region17: #{vae_forward.1} parent=1 // pred_fallthru
      _
    // Predicated region
    $region18: #{vae_forward.1} parent=1 // pred_check
      _
    $region19: #{vae_forward.1} parent=1 // pred_check_branch
      %39 = sbr.rel (0) target = $region21
    $region20: #{vae_forward.1} parent=1 // pred_region
      _
    $region21: #{vae_forward.1} parent=1 // pred_fallthru
      _
    // Predicated region
    $region22: #{vae_forward.1} parent=1 // pred_check
      _
    $region23: #{vae_forward.1} parent=1 // pred_check_branch
      %41 = sbr.rel (0) target = $region25
    $region24: #{vae_forward.1} parent=1 // pred_region
      _
    $region25: #{vae_forward.1} parent=1 // pred_fallthru
      _
    // Predicated region
    $region26: #{vae_forward.1} parent=1 // pred_check
      _
    $region27: #{vae_forward.1} parent=1 // pred_check_branch
      %43 = sbr.rel (0) target = $region29
    $region28: #{vae_forward.1} parent=1 // pred_region
      %s45 = ssub.s32 1024, 1024
      %46 = vsyncadd [#allocation6], %s45
      %s47 = sshll.u32 [#allocation5], 4
      %s48 = int_to_ptr.vmem [resolvable:$true] %s47
      %53 = dma.hbm_to_vmem [thread:$0]  %s6, 1024, %s48, [#allocation6], 64, 64, 4
    $region29: #{vae_forward.1} parent=1 // pred_fallthru
      _
    // Predicated region
    $region30: #{vae_forward.1} parent=1 // pred_check
      _
    $region31: #{vae_forward.1} parent=1 // pred_check_branch
      %55 = sbr.rel (0) target = $region33
    $region32: #{vae_forward.1} parent=1 // pred_region
      _
    $region33: #{vae_forward.1} parent=1 // pred_fallthru
      _
    // Predicated region
    $region34: #{vae_forward.1} parent=1 // pred_check
      _
    $region35: #{vae_forward.1} parent=1 // pred_check_branch
      %57 = sbr.rel (0) target = $region37
    $region36: #{vae_forward.1} parent=1 // pred_region
      %s59 = ssub.s32 8192, 8192
      %60 = vsyncadd [#allocation6], %s59
      %s61 = sshll.u32 [#allocation7], 4
      %s62 = int_to_ptr.vmem [resolvable:$true] %s61
      %67 = dma.hbm_to_vmem [thread:$0]  %s8, 8192, %s62, [#allocation6], 512, 512, 32
    $region37: #{vae_forward.1} parent=1 // pred_fallthru
      _
    // Predicated region
    $region38: #{vae_forward.1} parent=1 // pred_check
      _
    $region39: #{vae_forward.1} parent=1 // pred_check_branch
      %69 = sbr.rel (0) target = $region41
    $region40: #{vae_forward.1} parent=1 // pred_region
      _
    $region41: #{vae_forward.1} parent=1 // pred_fallthru
      _
    // Predicated region
    $region42: #{vae_forward.1} parent=1 // pred_check
      _
    $region43: #{vae_forward.1} parent=1 // pred_check_branch
      %71 = sbr.rel (0) target = $region45
    $region44: #{vae_forward.1} parent=1 // pred_region
      %72 = dma.done [#allocation3], 8192
    $region45: #{vae_forward.1} parent=1 // pred_fallthru
      _
    // Predicated region
    $region46: #{vae_forward.1} parent=1 // pred_check
      _
    $region47: #{vae_forward.1} parent=1 // pred_check_branch
      %74 = sbr.rel (0) target = $region49
    $region48: #{vae_forward.1} parent=1 // pred_region
      %75 = dma.done [#allocation6], 1024
    $region49: #{vae_forward.1} parent=1 // pred_fallthru
      _
    // Predicated region
    $region50: #{vae_forward.1} parent=1 // pred_check
      _
    $region51: #{vae_forward.1} parent=1 // pred_check_branch
      %77 = sbr.rel (0) target = $region53
    $region52: #{vae_forward.1} parent=1 // pred_region
      %78 = dma.done [#allocation6], 8192
    $region53: #{vae_forward.1} parent=1 // pred_fallthru
      _
    %v80 = vld [vmem:[%s0] sm:$0xff]
    %v81 = vld [vmem:[%s0 + $0x8] sm:$0xff]
    %v82 = vld [vmem:[%s0 + $0x10] sm:$0xff]
    %v83 = vld [vmem:[%s0 + $0x18] sm:$0xff]
    %v84 = vld [vmem:[%s0 + $0x20] sm:$0xff]
    %v85 = vld [vmem:[%s0 + $0x28] sm:$0xff]
    %v86 = vld [vmem:[%s0 + $0x30] sm:$0xff]
    %v87 = vld [vmem:[%s0 + $0x38] sm:$0xff]
    %v96 = vcombine.low %v80, %v82
    %v97 = vcombine.high %v80, %v82
    %v98 = vcombine.low %v84, %v86
    %v99 = vcombine.high %v84, %v86
    %v101 = vunpack.c.l.s4 1983009808
    %v102 = vunpack.c.0.s8 %v101
    %v103 = vlaneseq
    %v104 = vshrl.u32 %v103, 7
    %v105 = vsub.s32 %v102, %v104
    %v106 = vrot.slane %v96, %v105
    %v108 = vunpack.c.l.s4 1983009808
    %v109 = vunpack.c.0.s8 %v108
    %v110 = vlaneseq
    %v111 = vshrl.u32 %v110, 7
    %v112 = vsub.s32 %v109, %v111
    %v113 = vrot.slane %v97, %v112
    %v115 = vunpack.c.l.s4 1983009808
    %v116 = vunpack.c.0.s8 %v115
    %v117 = vlaneseq
    %v118 = vshrl.u32 %v117, 7
    %v119 = vsub.s32 %v116, %v118
    %v120 = vrot.slane %v98, %v119
    %v122 = vunpack.c.l.s4 1983009808
    %v123 = vunpack.c.0.s8 %v122
    %v124 = vlaneseq
    %v125 = vshrl.u32 %v124, 7
    %v126 = vsub.s32 %v123, %v125
    %v127 = vrot.slane %v99, %v126
    %v128 = vcombine.low %v106, %v120
    %v129 = vcombine.high %v106, %v120
    %v130 = vcombine.low %v113, %v127
    %v131 = vcombine.high %v113, %v127
    %v132 = vcombine.low %v81, %v83
    %v133 = vcombine.high %v81, %v83
    %v134 = vcombine.low %v85, %v87
    %v135 = vcombine.high %v85, %v87
    %v137 = vunpack.c.l.s4 1983009808
    %v138 = vunpack.c.0.s8 %v137
    %v139 = vlaneseq
    %v140 = vshrl.u32 %v139, 7
    %v141 = vsub.s32 %v138, %v140
    %v142 = vrot.slane %v132, %v141
    %v144 = vunpack.c.l.s4 1983009808
    %v145 = vunpack.c.0.s8 %v144
    %v146 = vlaneseq
    %v147 = vshrl.u32 %v146, 7
    %v148 = vsub.s32 %v145, %v147
    %v149 = vrot.slane %v133, %v148
    %v151 = vunpack.c.l.s4 1983009808
    %v152 = vunpack.c.0.s8 %v151
    %v153 = vlaneseq
    %v154 = vshrl.u32 %v153, 7
    %v155 = vsub.s32 %v152, %v154
    %v156 = vrot.slane %v134, %v155
    %v158 = vunpack.c.l.s4 1983009808
    %v159 = vunpack.c.0.s8 %v158
    %v160 = vlaneseq
    %v161 = vshrl.u32 %v160, 7
    %v162 = vsub.s32 %v159, %v161
    %v163 = vrot.slane %v135, %v162
    %v164 = vcombine.low %v142, %v156
    %v165 = vcombine.high %v142, %v156
    %v166 = vcombine.low %v149, %v163
    %v167 = vcombine.high %v149, %v163
    %v176 = vpack.c.bf16 %v128, %v128
    %v177 = vpack.c.bf16 %v129, %v129
    %v178 = vpack.c.bf16 %v130, %v130
    %v179 = vpack.c.bf16 %v131, %v131
    %v180 = vpack.c.bf16 %v164, %v164
    %v181 = vpack.c.bf16 %v165, %v165
    %v182 = vpack.c.bf16 %v166, %v166
    %v183 = vpack.c.bf16 %v167, %v167
    %v184 = vld [vmem:[#allocation2] sm:$0xf]
    %v185 = vld [vmem:[#allocation2 + $0x4] sm:$0xf]
    %v186 = vld [vmem:[#allocation2 + $0x8] sm:$0xf]
    %v187 = vld [vmem:[#allocation2 + $0xc] sm:$0xf]
    %v188 = vld [vmem:[#allocation2 + $0x10] sm:$0xf]
    %v189 = vld [vmem:[#allocation2 + $0x14] sm:$0xf]
    %v190 = vld [vmem:[#allocation2 + $0x18] sm:$0xf]
    %v191 = vld [vmem:[#allocation2 + $0x1c] sm:$0xf]
    %v192 = vld [vmem:[#allocation2 + $0x20] sm:$0xf]
    %v193 = vld [vmem:[#allocation2 + $0x24] sm:$0xf]
    %v194 = vld [vmem:[#allocation2 + $0x28] sm:$0xf]
    %v195 = vld [vmem:[#allocation2 + $0x2c] sm:$0xf]
    %v196 = vld [vmem:[#allocation2 + $0x30] sm:$0xf]
    %v197 = vld [vmem:[#allocation2 + $0x34] sm:$0xf]
    %v198 = vld [vmem:[#allocation2 + $0x38] sm:$0xf]
    %v199 = vld [vmem:[#allocation2 + $0x3c] sm:$0xf]
    %v200 = vld [vmem:[#allocation2 + $0x40] sm:$0xf]
    %v201 = vld [vmem:[#allocation2 + $0x44] sm:$0xf]
    %v202 = vld [vmem:[#allocation2 + $0x48] sm:$0xf]
    %v203 = vld [vmem:[#allocation2 + $0x4c] sm:$0xf]
    %v204 = vld [vmem:[#allocation2 + $0x50] sm:$0xf]
    %v205 = vld [vmem:[#allocation2 + $0x54] sm:$0xf]
    %v206 = vld [vmem:[#allocation2 + $0x58] sm:$0xf]
    %v207 = vld [vmem:[#allocation2 + $0x5c] sm:$0xf]
    %v208 = vld [vmem:[#allocation2 + $0x60] sm:$0xf]
    %v209 = vld [vmem:[#allocation2 + $0x64] sm:$0xf]
    %v210 = vld [vmem:[#allocation2 + $0x68] sm:$0xf]
    %v211 = vld [vmem:[#allocation2 + $0x6c] sm:$0xf]
    %v212 = vld [vmem:[#allocation2 + $0x70] sm:$0xf]
    %v213 = vld [vmem:[#allocation2 + $0x74] sm:$0xf]
    %v214 = vld [vmem:[#allocation2 + $0x78] sm:$0xf]
    %v215 = vld [vmem:[#allocation2 + $0x7c] sm:$0xf]
    %v216 = vld [vmem:[#allocation2 + $0x80] sm:$0xf]
    %v217 = vld [vmem:[#allocation2 + $0x84] sm:$0xf]
    %v218 = vld [vmem:[#allocation2 + $0x88] sm:$0xf]
    %v219 = vld [vmem:[#allocation2 + $0x8c] sm:$0xf]
    %v220 = vld [vmem:[#allocation2 + $0x90] sm:$0xf]
    %v221 = vld [vmem:[#allocation2 + $0x94] sm:$0xf]
    %v222 = vld [vmem:[#allocation2 + $0x98] sm:$0xf]
    %v223 = vld [vmem:[#allocation2 + $0x9c] sm:$0xf]
    %v224 = vld [vmem:[#allocation2 + $0xa0] sm:$0xf]
    %v225 = vld [vmem:[#allocation2 + $0xa4] sm:$0xf]
    %v226 = vld [vmem:[#allocation2 + $0xa8] sm:$0xf]
    %v227 = vld [vmem:[#allocation2 + $0xac] sm:$0xf]
    %v228 = vld [vmem:[#allocation2 + $0xb0] sm:$0xf]
    %v229 = vld [vmem:[#allocation2 + $0xb4] sm:$0xf]
    %v230 = vld [vmem:[#allocation2 + $0xb8] sm:$0xf]
    %v231 = vld [vmem:[#allocation2 + $0xbc] sm:$0xf]
    %v232 = vld [vmem:[#allocation2 + $0xc0] sm:$0xf]
    %v233 = vld [vmem:[#allocation2 + $0xc4] sm:$0xf]
    %v234 = vld [vmem:[#allocation2 + $0xc8] sm:$0xf]
    %v235 = vld [vmem:[#allocation2 + $0xcc] sm:$0xf]
    %v236 = vld [vmem:[#allocation2 + $0xd0] sm:$0xf]
    %v237 = vld [vmem:[#allocation2 + $0xd4] sm:$0xf]
    %v238 = vld [vmem:[#allocation2 + $0xd8] sm:$0xf]
    %v239 = vld [vmem:[#allocation2 + $0xdc] sm:$0xf]
    %v240 = vld [vmem:[#allocation2 + $0xe0] sm:$0xf]
    %v241 = vld [vmem:[#allocation2 + $0xe4] sm:$0xf]
    %v242 = vld [vmem:[#allocation2 + $0xe8] sm:$0xf]
    %v243 = vld [vmem:[#allocation2 + $0xec] sm:$0xf]
    %v244 = vld [vmem:[#allocation2 + $0xf0] sm:$0xf]
    %v245 = vld [vmem:[#allocation2 + $0xf4] sm:$0xf]
    %v246 = vld [vmem:[#allocation2 + $0xf8] sm:$0xf]
    %v247 = vld [vmem:[#allocation2 + $0xfc] sm:$0xf]
    %v248 = vld [vmem:[#allocation2 + $0x100] sm:$0xf]
    %v249 = vld [vmem:[#allocation2 + $0x104] sm:$0xf]
    %v250 = vld [vmem:[#allocation2 + $0x108] sm:$0xf]
    %v251 = vld [vmem:[#allocation2 + $0x10c] sm:$0xf]
    %v252 = vld [vmem:[#allocation2 + $0x110] sm:$0xf]
    %v253 = vld [vmem:[#allocation2 + $0x114] sm:$0xf]
    %v254 = vld [vmem:[#allocation2 + $0x118] sm:$0xf]
    %v255 = vld [vmem:[#allocation2 + $0x11c] sm:$0xf]
    %v256 = vld [vmem:[#allocation2 + $0x120] sm:$0xf]
    %v257 = vld [vmem:[#allocation2 + $0x124] sm:$0xf]
    %v258 = vld [vmem:[#allocation2 + $0x128] sm:$0xf]
    %v259 = vld [vmem:[#allocation2 + $0x12c] sm:$0xf]
    %v260 = vld [vmem:[#allocation2 + $0x130] sm:$0xf]
    %v261 = vld [vmem:[#allocation2 + $0x134] sm:$0xf]
    %v262 = vld [vmem:[#allocation2 + $0x138] sm:$0xf]
    %v263 = vld [vmem:[#allocation2 + $0x13c] sm:$0xf]
    %v264 = vld [vmem:[#allocation2 + $0x140] sm:$0xf]
    %v265 = vld [vmem:[#allocation2 + $0x144] sm:$0xf]
    %v266 = vld [vmem:[#allocation2 + $0x148] sm:$0xf]
    %v267 = vld [vmem:[#allocation2 + $0x14c] sm:$0xf]
    %v268 = vld [vmem:[#allocation2 + $0x150] sm:$0xf]
    %v269 = vld [vmem:[#allocation2 + $0x154] sm:$0xf]
    %v270 = vld [vmem:[#allocation2 + $0x158] sm:$0xf]
    %v271 = vld [vmem:[#allocation2 + $0x15c] sm:$0xf]
    %v272 = vld [vmem:[#allocation2 + $0x160] sm:$0xf]
    %v273 = vld [vmem:[#allocation2 + $0x164] sm:$0xf]
    %v274 = vld [vmem:[#allocation2 + $0x168] sm:$0xf]
    %v275 = vld [vmem:[#allocation2 + $0x16c] sm:$0xf]
    %v276 = vld [vmem:[#allocation2 + $0x170] sm:$0xf]
    %v277 = vld [vmem:[#allocation2 + $0x174] sm:$0xf]
    %v278 = vld [vmem:[#allocation2 + $0x178] sm:$0xf]
    %v279 = vld [vmem:[#allocation2 + $0x17c] sm:$0xf]
    %v280 = vld [vmem:[#allocation2 + $0x180] sm:$0xf]
    %v281 = vld [vmem:[#allocation2 + $0x184] sm:$0xf]
    %v282 = vld [vmem:[#allocation2 + $0x188] sm:$0xf]
    %v283 = vld [vmem:[#allocation2 + $0x18c] sm:$0xf]
    %v284 = vld [vmem:[#allocation2 + $0x190] sm:$0xf]
    %v285 = vld [vmem:[#allocation2 + $0x194] sm:$0xf]
    %v286 = vld [vmem:[#allocation2 + $0x198] sm:$0xf]
    %v287 = vld [vmem:[#allocation2 + $0x19c] sm:$0xf]
    %v288 = vld [vmem:[#allocation2 + $0x1a0] sm:$0xf]
    %v289 = vld [vmem:[#allocation2 + $0x1a4] sm:$0xf]
    %v290 = vld [vmem:[#allocation2 + $0x1a8] sm:$0xf]
    %v291 = vld [vmem:[#allocation2 + $0x1ac] sm:$0xf]
    %v292 = vld [vmem:[#allocation2 + $0x1b0] sm:$0xf]
    %v293 = vld [vmem:[#allocation2 + $0x1b4] sm:$0xf]
    %v294 = vld [vmem:[#allocation2 + $0x1b8] sm:$0xf]
    %v295 = vld [vmem:[#allocation2 + $0x1bc] sm:$0xf]
    %v296 = vld [vmem:[#allocation2 + $0x1c0] sm:$0xf]
    %v297 = vld [vmem:[#allocation2 + $0x1c4] sm:$0xf]
    %v298 = vld [vmem:[#allocation2 + $0x1c8] sm:$0xf]
    %v299 = vld [vmem:[#allocation2 + $0x1cc] sm:$0xf]
    %v300 = vld [vmem:[#allocation2 + $0x1d0] sm:$0xf]
    %v301 = vld [vmem:[#allocation2 + $0x1d4] sm:$0xf]
    %v302 = vld [vmem:[#allocation2 + $0x1d8] sm:$0xf]
    %v303 = vld [vmem:[#allocation2 + $0x1dc] sm:$0xf]
    %v304 = vld [vmem:[#allocation2 + $0x1e0] sm:$0xf]
    %v305 = vld [vmem:[#allocation2 + $0x1e4] sm:$0xf]
    %v306 = vld [vmem:[#allocation2 + $0x1e8] sm:$0xf]
    %v307 = vld [vmem:[#allocation2 + $0x1ec] sm:$0xf]
    %v308 = vld [vmem:[#allocation2 + $0x1f0] sm:$0xf]
    %v309 = vld [vmem:[#allocation2 + $0x1f4] sm:$0xf]
    %v310 = vld [vmem:[#allocation2 + $0x1f8] sm:$0xf]
    %v311 = vld [vmem:[#allocation2 + $0x1fc] sm:$0xf]
    %v312 = vld [vmem:[%s3] sm:$0x1]
    %v314 = vlaneseq
    %v315 = vshrl.u32 %v314, 7
    %v316 = vsub.s32 0, %v315
    %v317 = vrot.slane %v312, %v316
    %v447 = vunpack.c.l.b16 %v184
    %v448 = vunpack.c.l.b16 %v185
    %v449 = vunpack.c.l.b16 %v186
    %v450 = vunpack.c.l.b16 %v187
    %v451 = vunpack.c.l.b16 %v188
    %v452 = vunpack.c.l.b16 %v189
    %v453 = vunpack.c.l.b16 %v190
    %v454 = vunpack.c.l.b16 %v191
    %v455 = vunpack.c.l.b16 %v192
    %v456 = vunpack.c.l.b16 %v193
    %v457 = vunpack.c.l.b16 %v194
    %v458 = vunpack.c.l.b16 %v195
    %v459 = vunpack.c.l.b16 %v196
    %v460 = vunpack.c.l.b16 %v197
    %v461 = vunpack.c.l.b16 %v198
    %v462 = vunpack.c.l.b16 %v199
    %v463 = vunpack.c.l.b16 %v200
    %v464 = vunpack.c.l.b16 %v201
    %v465 = vunpack.c.l.b16 %v202
    %v466 = vunpack.c.l.b16 %v203
    %v467 = vunpack.c.l.b16 %v204
    %v468 = vunpack.c.l.b16 %v205
    %v469 = vunpack.c.l.b16 %v206
    %v470 = vunpack.c.l.b16 %v207
    %v471 = vunpack.c.l.b16 %v208
    %v472 = vunpack.c.l.b16 %v209
    %v473 = vunpack.c.l.b16 %v210
    %v474 = vunpack.c.l.b16 %v211
    %v475 = vunpack.c.l.b16 %v212
    %v476 = vunpack.c.l.b16 %v213
    %v477 = vunpack.c.l.b16 %v214
    %v478 = vunpack.c.l.b16 %v215
    %v479 = vunpack.c.l.b16 %v216
    %v480 = vunpack.c.l.b16 %v217
    %v481 = vunpack.c.l.b16 %v218
    %v482 = vunpack.c.l.b16 %v219
    %v483 = vunpack.c.l.b16 %v220
    %v484 = vunpack.c.l.b16 %v221
    %v485 = vunpack.c.l.b16 %v222
    %v486 = vunpack.c.l.b16 %v223
    %v487 = vunpack.c.l.b16 %v224
    %v488 = vunpack.c.l.b16 %v225
    %v489 = vunpack.c.l.b16 %v226
    %v490 = vunpack.c.l.b16 %v227
    %v491 = vunpack.c.l.b16 %v228
    %v492 = vunpack.c.l.b16 %v229
    %v493 = vunpack.c.l.b16 %v230
    %v494 = vunpack.c.l.b16 %v231
    %v495 = vunpack.c.l.b16 %v232
    %v496 = vunpack.c.l.b16 %v233
    %v497 = vunpack.c.l.b16 %v234
    %v498 = vunpack.c.l.b16 %v235
    %v499 = vunpack.c.l.b16 %v236
    %v500 = vunpack.c.l.b16 %v237
    %v501 = vunpack.c.l.b16 %v238
    %v502 = vunpack.c.l.b16 %v239
    %v503 = vunpack.c.l.b16 %v240
    %v504 = vunpack.c.l.b16 %v241
    %v505 = vunpack.c.l.b16 %v242
    %v506 = vunpack.c.l.b16 %v243
    %v507 = vunpack.c.l.b16 %v244
    %v508 = vunpack.c.l.b16 %v245
    %v509 = vunpack.c.l.b16 %v246
    %v510 = vunpack.c.l.b16 %v247
    %v511 = vunpack.c.l.b16 %v248
    %v512 = vunpack.c.l.b16 %v249
    %v513 = vunpack.c.l.b16 %v250
    %v514 = vunpack.c.l.b16 %v251
    %v515 = vunpack.c.l.b16 %v252
    %v516 = vunpack.c.l.b16 %v253
    %v517 = vunpack.c.l.b16 %v254
    %v518 = vunpack.c.l.b16 %v255
    %v519 = vunpack.c.l.b16 %v256
    %v520 = vunpack.c.l.b16 %v257
    %v521 = vunpack.c.l.b16 %v258
    %v522 = vunpack.c.l.b16 %v259
    %v523 = vunpack.c.l.b16 %v260
    %v524 = vunpack.c.l.b16 %v261
    %v525 = vunpack.c.l.b16 %v262
    %v526 = vunpack.c.l.b16 %v263
    %v527 = vunpack.c.l.b16 %v264
    %v528 = vunpack.c.l.b16 %v265
    %v529 = vunpack.c.l.b16 %v266
    %v530 = vunpack.c.l.b16 %v267
    %v531 = vunpack.c.l.b16 %v268
    %v532 = vunpack.c.l.b16 %v269
    %v533 = vunpack.c.l.b16 %v270
    %v534 = vunpack.c.l.b16 %v271
    %v535 = vunpack.c.l.b16 %v272
    %v536 = vunpack.c.l.b16 %v273
    %v537 = vunpack.c.l.b16 %v274
    %v538 = vunpack.c.l.b16 %v275
    %v539 = vunpack.c.l.b16 %v276
    %v540 = vunpack.c.l.b16 %v277
    %v541 = vunpack.c.l.b16 %v278
    %v542 = vunpack.c.l.b16 %v279
    %v543 = vunpack.c.l.b16 %v280
    %v544 = vunpack.c.l.b16 %v281
    %v545 = vunpack.c.l.b16 %v282
    %v546 = vunpack.c.l.b16 %v283
    %v547 = vunpack.c.l.b16 %v284
    %v548 = vunpack.c.l.b16 %v285
    %v549 = vunpack.c.l.b16 %v286
    %v550 = vunpack.c.l.b16 %v287
    %v551 = vunpack.c.l.b16 %v288
    %v552 = vunpack.c.l.b16 %v289
    %v553 = vunpack.c.l.b16 %v290
    %v554 = vunpack.c.l.b16 %v291
    %v555 = vunpack.c.l.b16 %v292
    %v556 = vunpack.c.l.b16 %v293
    %v557 = vunpack.c.l.b16 %v294
    %v558 = vunpack.c.l.b16 %v295
    %v559 = vunpack.c.l.b16 %v296
    %v560 = vunpack.c.l.b16 %v297
    %v561 = vunpack.c.l.b16 %v298
    %v562 = vunpack.c.l.b16 %v299
    %v563 = vunpack.c.l.b16 %v300
    %v564 = vunpack.c.l.b16 %v301
    %v565 = vunpack.c.l.b16 %v302
    %v566 = vunpack.c.l.b16 %v303
    %v567 = vunpack.c.l.b16 %v304
    %v568 = vunpack.c.l.b16 %v305
    %v569 = vunpack.c.l.b16 %v306
    %v570 = vunpack.c.l.b16 %v307
    %v571 = vunpack.c.l.b16 %v308
    %v572 = vunpack.c.l.b16 %v309
    %v573 = vunpack.c.l.b16 %v310
    %v574 = vunpack.c.l.b16 %v311
    %v575 = vpack.c.b16 %v448, %v447
    %v576 = vpack.c.b16 %v450, %v449
    %v577 = vpack.c.b16 %v452, %v451
    %v578 = vpack.c.b16 %v454, %v453
    %v579 = vpack.c.b16 %v456, %v455
    %v580 = vpack.c.b16 %v458, %v457
    %v581 = vpack.c.b16 %v460, %v459
    %v582 = vpack.c.b16 %v462, %v461
    %v583 = vpack.c.b16 %v464, %v463
    %v584 = vpack.c.b16 %v466, %v465
    %v585 = vpack.c.b16 %v468, %v467
    %v586 = vpack.c.b16 %v470, %v469
    %v587 = vpack.c.b16 %v472, %v471
    %v588 = vpack.c.b16 %v474, %v473
    %v589 = vpack.c.b16 %v476, %v475
    %v590 = vpack.c.b16 %v478, %v477
    %v591 = vpack.c.b16 %v480, %v479
    %v592 = vpack.c.b16 %v482, %v481
    %v593 = vpack.c.b16 %v484, %v483
    %v594 = vpack.c.b16 %v486, %v485
    %v595 = vpack.c.b16 %v488, %v487
    %v596 = vpack.c.b16 %v490, %v489
    %v597 = vpack.c.b16 %v492, %v491
    %v598 = vpack.c.b16 %v494, %v493
    %v599 = vpack.c.b16 %v496, %v495
    %v600 = vpack.c.b16 %v498, %v497
    %v601 = vpack.c.b16 %v500, %v499
    %v602 = vpack.c.b16 %v502, %v501
    %v603 = vpack.c.b16 %v504, %v503
    %v604 = vpack.c.b16 %v506, %v505
    %v605 = vpack.c.b16 %v508, %v507
    %v606 = vpack.c.b16 %v510, %v509
    %v607 = vpack.c.b16 %v512, %v511
    %v608 = vpack.c.b16 %v514, %v513
    %v609 = vpack.c.b16 %v516, %v515
    %v610 = vpack.c.b16 %v518, %v517
    %v611 = vpack.c.b16 %v520, %v519
    %v612 = vpack.c.b16 %v522, %v521
    %v613 = vpack.c.b16 %v524, %v523
    %v614 = vpack.c.b16 %v526, %v525
    %v615 = vpack.c.b16 %v528, %v527
    %v616 = vpack.c.b16 %v530, %v529
    %v617 = vpack.c.b16 %v532, %v531
    %v618 = vpack.c.b16 %v534, %v533
    %v619 = vpack.c.b16 %v536, %v535
    %v620 = vpack.c.b16 %v538, %v537
    %v621 = vpack.c.b16 %v540, %v539
    %v622 = vpack.c.b16 %v542, %v541
    %v623 = vpack.c.b16 %v544, %v543
    %v624 = vpack.c.b16 %v546, %v545
    %v625 = vpack.c.b16 %v548, %v547
    %v626 = vpack.c.b16 %v550, %v549
    %v627 = vpack.c.b16 %v552, %v551
    %v628 = vpack.c.b16 %v554, %v553
    %v629 = vpack.c.b16 %v556, %v555
    %v630 = vpack.c.b16 %v558, %v557
    %v631 = vpack.c.b16 %v560, %v559
    %v632 = vpack.c.b16 %v562, %v561
    %v633 = vpack.c.b16 %v564, %v563
    %v634 = vpack.c.b16 %v566, %v565
    %v635 = vpack.c.b16 %v568, %v567
    %v636 = vpack.c.b16 %v570, %v569
    %v637 = vpack.c.b16 %v572, %v571
    %v638 = vpack.c.b16 %v574, %v573
    %703 = vmatprep.subr.bf16.mxu0 0
    %704 = vmatpush1.bf16.msra.mxu0 %v582
    %705 = vmatprep.subr.bf16.mxu0 0
    %706 = vmatpush1.bf16.msra.mxu0 %v581
    %707 = vmatprep.subr.bf16.mxu0 0
    %708 = vmatpush1.bf16.msra.mxu0 %v580
    %709 = vmatprep.subr.bf16.mxu0 0
    %710 = vmatpush1.bf16.msra.mxu0 %v579
    %711 = vmatprep.subr.bf16.mxu0 0
    %712 = vmatpush1.bf16.msra.mxu0 %v578
    %713 = vmatprep.subr.bf16.mxu0 0
    %714 = vmatpush1.bf16.msra.mxu0 %v577
    %715 = vmatprep.subr.bf16.mxu0 0
    %716 = vmatpush1.bf16.msra.mxu0 %v576
    %717 = vmatprep.subr.bf16.mxu0 0
    %718 = vmatpush1.bf16.msra.mxu0 %v575
    %719 = vmatprep.subr.bf16.mxu0 0
    %720 = vmatpush2.bf16.msra.mxu0 %v590
    %721 = vmatprep.subr.bf16.mxu0 0
    %722 = vmatpush2.bf16.msra.mxu0 %v589
    %723 = vmatprep.subr.bf16.mxu0 0
    %724 = vmatpush2.bf16.msra.mxu0 %v588
    %725 = vmatprep.subr.bf16.mxu0 0
    %726 = vmatpush2.bf16.msra.mxu0 %v587
    %727 = vmatprep.subr.bf16.mxu0 0
    %728 = vmatpush2.bf16.msra.mxu0 %v586
    %729 = vmatprep.subr.bf16.mxu0 0
    %730 = vmatpush2.bf16.msra.mxu0 %v585
    %731 = vmatprep.subr.bf16.mxu0 0
    %732 = vmatpush2.bf16.msra.mxu0 %v584
    %733 = vmatprep.subr.bf16.mxu0 0
    %734 = vmatpush2.bf16.msra.mxu0 %v583
    %735 = vmatprep.mubr.bf16.mxu0 %v177
    %736 = vmatmul.mubr.bf16.gmra.mxu0 %v176
    %v737 = vpop.f32.mrf.mxu0
    %v738 = vadd.f32 %v317, %v737
    %v739 = vpop.f32.mrf.mxu0
    %v740 = vpop.f32.mrf.mxu0
    %v741 = vpop.f32.mrf.mxu0
    %742 = vdwg.mxu0
    %743 = vmatprep.subr.bf16.mxu0 0
    %744 = vmatpush1.bf16.msra.mxu0 %v598
    %745 = vmatprep.subr.bf16.mxu0 0
    %746 = vmatpush1.bf16.msra.mxu0 %v597
    %747 = vmatprep.subr.bf16.mxu0 0
    %748 = vmatpush1.bf16.msra.mxu0 %v596
    %749 = vmatprep.subr.bf16.mxu0 0
    %750 = vmatpush1.bf16.msra.mxu0 %v595
    %751 = vmatprep.subr.bf16.mxu0 0
    %752 = vmatpush1.bf16.msra.mxu0 %v594
    %753 = vmatprep.subr.bf16.mxu0 0
    %754 = vmatpush1.bf16.msra.mxu0 %v593
    %755 = vmatprep.subr.bf16.mxu0 0
    %756 = vmatpush1.bf16.msra.mxu0 %v592
    %757 = vmatprep.subr.bf16.mxu0 0
    %758 = vmatpush1.bf16.msra.mxu0 %v591
    %759 = vmatprep.subr.bf16.mxu0 0
    %760 = vmatpush2.bf16.msra.mxu0 %v606
    %761 = vmatprep.subr.bf16.mxu0 0
    %762 = vmatpush2.bf16.msra.mxu0 %v605
    %763 = vmatprep.subr.bf16.mxu0 0
    %764 = vmatpush2.bf16.msra.mxu0 %v604
    %765 = vmatprep.subr.bf16.mxu0 0
    %766 = vmatpush2.bf16.msra.mxu0 %v603
    %767 = vmatprep.subr.bf16.mxu0 0
    %768 = vmatpush2.bf16.msra.mxu0 %v602
    %769 = vmatprep.subr.bf16.mxu0 0
    %770 = vmatpush2.bf16.msra.mxu0 %v601
    %771 = vmatprep.subr.bf16.mxu0 0
    %772 = vmatpush2.bf16.msra.mxu0 %v600
    %773 = vmatprep.subr.bf16.mxu0 0
    %774 = vmatpush2.bf16.msra.mxu0 %v599
    %775 = vmatprep.mubr.bf16.mxu0 %v179
    %776 = vmatmul.mubr.bf16.gmra.mxu0 %v178
    %v777 = vpop.f32.mrf.mxu0
    %v778 = vadd.f32 %v738, %v777
    %v779 = vpop.f32.mrf.mxu0
    %v780 = vpop.f32.mrf.mxu0
    %v781 = vpop.f32.mrf.mxu0
    %782 = vdwg.mxu0
    %783 = vmatprep.subr.bf16.mxu0 0
    %784 = vmatpush1.bf16.msra.mxu0 %v614
    %785 = vmatprep.subr.bf16.mxu0 0
    %786 = vmatpush1.bf16.msra.mxu0 %v613
    %787 = vmatprep.subr.bf16.mxu0 0
    %788 = vmatpush1.bf16.msra.mxu0 %v612
    %789 = vmatprep.subr.bf16.mxu0 0
    %790 = vmatpush1.bf16.msra.mxu0 %v611
    %791 = vmatprep.subr.bf16.mxu0 0
    %792 = vmatpush1.bf16.msra.mxu0 %v610
    %793 = vmatprep.subr.bf16.mxu0 0
    %794 = vmatpush1.bf16.msra.mxu0 %v609
    %795 = vmatprep.subr.bf16.mxu0 0
    %796 = vmatpush1.bf16.msra.mxu0 %v608
    %797 = vmatprep.subr.bf16.mxu0 0
    %798 = vmatpush1.bf16.msra.mxu0 %v607
    %799 = vmatprep.subr.bf16.mxu0 0
    %800 = vmatpush2.bf16.msra.mxu0 %v622
    %801 = vmatprep.subr.bf16.mxu0 0
    %802 = vmatpush2.bf16.msra.mxu0 %v621
    %803 = vmatprep.subr.bf16.mxu0 0
    %804 = vmatpush2.bf16.msra.mxu0 %v620
    %805 = vmatprep.subr.bf16.mxu0 0
    %806 = vmatpush2.bf16.msra.mxu0 %v619
    %807 = vmatprep.subr.bf16.mxu0 0
    %808 = vmatpush2.bf16.msra.mxu0 %v618
    %809 = vmatprep.subr.bf16.mxu0 0
    %810 = vmatpush2.bf16.msra.mxu0 %v617
    %811 = vmatprep.subr.bf16.mxu0 0
    %812 = vmatpush2.bf16.msra.mxu0 %v616
    %813 = vmatprep.subr.bf16.mxu0 0
    %814 = vmatpush2.bf16.msra.mxu0 %v615
    %815 = vmatprep.mubr.bf16.mxu0 %v181
    %816 = vmatmul.mubr.bf16.gmra.mxu0 %v180
    %v817 = vpop.f32.mrf.mxu0
    %v818 = vadd.f32 %v778, %v817
    %v819 = vpop.f32.mrf.mxu0
    %v820 = vpop.f32.mrf.mxu0
    %v821 = vpop.f32.mrf.mxu0
    %822 = vdwg.mxu0
    %823 = vmatprep.subr.bf16.mxu0 0
    %824 = vmatpush1.bf16.msra.mxu0 %v630
    %825 = vmatprep.subr.bf16.mxu0 0
    %826 = vmatpush1.bf16.msra.mxu0 %v629
    %827 = vmatprep.subr.bf16.mxu0 0
    %828 = vmatpush1.bf16.msra.mxu0 %v628
    %829 = vmatprep.subr.bf16.mxu0 0
    %830 = vmatpush1.bf16.msra.mxu0 %v627
    %831 = vmatprep.subr.bf16.mxu0 0
    %832 = vmatpush1.bf16.msra.mxu0 %v626
    %833 = vmatprep.subr.bf16.mxu0 0
    %834 = vmatpush1.bf16.msra.mxu0 %v625
    %835 = vmatprep.subr.bf16.mxu0 0
    %836 = vmatpush1.bf16.msra.mxu0 %v624
    %837 = vmatprep.subr.bf16.mxu0 0
    %838 = vmatpush1.bf16.msra.mxu0 %v623
    %839 = vmatprep.subr.bf16.mxu0 0
    %840 = vmatpush2.bf16.msra.mxu0 %v638
    %841 = vmatprep.subr.bf16.mxu0 0
    %842 = vmatpush2.bf16.msra.mxu0 %v637
    %843 = vmatprep.subr.bf16.mxu0 0
    %844 = vmatpush2.bf16.msra.mxu0 %v636
    %845 = vmatprep.subr.bf16.mxu0 0
    %846 = vmatpush2.bf16.msra.mxu0 %v635
    %847 = vmatprep.subr.bf16.mxu0 0
    %848 = vmatpush2.bf16.msra.mxu0 %v634
    %849 = vmatprep.subr.bf16.mxu0 0
    %850 = vmatpush2.bf16.msra.mxu0 %v633
    %851 = vmatprep.subr.bf16.mxu0 0
    %852 = vmatpush2.bf16.msra.mxu0 %v632
    %853 = vmatprep.subr.bf16.mxu0 0
    %854 = vmatpush2.bf16.msra.mxu0 %v631
    %855 = vmatprep.mubr.bf16.mxu0 %v183
    %856 = vmatmul.mubr.bf16.gmra.mxu0 %v182
    %v857 = vpop.f32.mrf.mxu0
    %v858 = vadd.f32 %v818, %v857
    %v859 = vpop.f32.mrf.mxu0
    %v860 = vpop.f32.mrf.mxu0
    %v861 = vpop.f32.mrf.mxu0
    %862 = vdwg.mxu0
    %v863 = vmax.f32 %v858, 0.0
    %v864 = vpack.c.bf16 %v863, %v863
    %v865 = vld [vmem:[%s4] sm:$0xff]
    %v866 = vld [vmem:[%s4 + $0x8] sm:$0xff]
    %v867 = vld [vmem:[%s4 + $0x10] sm:$0xff]
    %v868 = vld [vmem:[%s4 + $0x18] sm:$0xff]
    %v869 = vld [vmem:[%s4 + $0x20] sm:$0xff]
    %v870 = vld [vmem:[%s4 + $0x28] sm:$0xff]
    %v871 = vld [vmem:[%s4 + $0x30] sm:$0xff]
    %v872 = vld [vmem:[%s4 + $0x38] sm:$0xff]
    %v873 = vld [vmem:[%s4 + $0x40] sm:$0xff]
    %v874 = vld [vmem:[%s4 + $0x48] sm:$0xff]
    %v875 = vld [vmem:[%s4 + $0x50] sm:$0xff]
    %v876 = vld [vmem:[%s4 + $0x58] sm:$0xff]
    %v877 = vld [vmem:[%s4 + $0x60] sm:$0xff]
    %v878 = vld [vmem:[%s4 + $0x68] sm:$0xff]
    %v879 = vld [vmem:[%s4 + $0x70] sm:$0xff]
    %v880 = vld [vmem:[%s4 + $0x78] sm:$0xff]
    %v881 = vld [vmem:[%s5] sm:$0x3]
    %v883 = vlaneseq
    %v884 = vshrl.u32 %v883, 7
    %v885 = vsub.s32 0, %v884
    %v886 = vrot.slane %v881, %v885
    %v887 = vlaneseq
    %v888 = vshrl.u32 %v887, 7
    %v889 = vsub.s32 1, %v888
    %v890 = vrot.slane %v881, %v889
    %v909 = vunpack.c.l.b16 %v865
    %v910 = vunpack.c.h.b16 %v865
    %v911 = vunpack.c.l.b16 %v866
    %v912 = vunpack.c.h.b16 %v866
    %v913 = vunpack.c.l.b16 %v867
    %v914 = vunpack.c.h.b16 %v867
    %v915 = vunpack.c.l.b16 %v868
    %v916 = vunpack.c.h.b16 %v868
    %v917 = vunpack.c.l.b16 %v869
    %v918 = vunpack.c.h.b16 %v869
    %v919 = vunpack.c.l.b16 %v870
    %v920 = vunpack.c.h.b16 %v870
    %v921 = vunpack.c.l.b16 %v871
    %v922 = vunpack.c.h.b16 %v871
    %v923 = vunpack.c.l.b16 %v872
    %v924 = vunpack.c.h.b16 %v872
    %v925 = vunpack.c.l.b16 %v873
    %v926 = vunpack.c.h.b16 %v873
    %v927 = vunpack.c.l.b16 %v874
    %v928 = vunpack.c.h.b16 %v874
    %v929 = vunpack.c.l.b16 %v875
    %v930 = vunpack.c.h.b16 %v875
    %v931 = vunpack.c.l.b16 %v876
    %v932 = vunpack.c.h.b16 %v876
    %v933 = vunpack.c.l.b16 %v877
    %v934 = vunpack.c.h.b16 %v877
    %v935 = vunpack.c.l.b16 %v878
    %v936 = vunpack.c.h.b16 %v878
    %v937 = vunpack.c.l.b16 %v879
    %v938 = vunpack.c.h.b16 %v879
    %v939 = vunpack.c.l.b16 %v880
    %v940 = vunpack.c.h.b16 %v880
    %v941 = vpack.c.b16 %v911, %v909
    %v942 = vpack.c.b16 %v912, %v910
    %v943 = vpack.c.b16 %v915, %v913
    %v944 = vpack.c.b16 %v916, %v914
    %v945 = vpack.c.b16 %v919, %v917
    %v946 = vpack.c.b16 %v920, %v918
    %v947 = vpack.c.b16 %v923, %v921
    %v948 = vpack.c.b16 %v924, %v922
    %v949 = vpack.c.b16 %v927, %v925
    %v950 = vpack.c.b16 %v928, %v926
    %v951 = vpack.c.b16 %v931, %v929
    %v952 = vpack.c.b16 %v932, %v930
    %v953 = vpack.c.b16 %v935, %v933
    %v954 = vpack.c.b16 %v936, %v934
    %v955 = vpack.c.b16 %v939, %v937
    %v956 = vpack.c.b16 %v940, %v938
    %973 = vmatprep.subr.bf16.mxu0 %v956
    %974 = vmatpush1.bf16.msra.mxu0 %v955
    %975 = vmatprep.subr.bf16.mxu0 %v954
    %976 = vmatpush1.bf16.msra.mxu0 %v953
    %977 = vmatprep.subr.bf16.mxu0 %v952
    %978 = vmatpush1.bf16.msra.mxu0 %v951
    %979 = vmatprep.subr.bf16.mxu0 %v950
    %980 = vmatpush1.bf16.msra.mxu0 %v949
    %981 = vmatprep.subr.bf16.mxu0 %v948
    %982 = vmatpush1.bf16.msra.mxu0 %v947
    %983 = vmatprep.subr.bf16.mxu0 %v946
    %984 = vmatpush1.bf16.msra.mxu0 %v945
    %985 = vmatprep.subr.bf16.mxu0 %v944
    %986 = vmatpush1.bf16.msra.mxu0 %v943
    %987 = vmatprep.subr.bf16.mxu0 %v942
    %988 = vmatpush1.bf16.msra.mxu0 %v941
    %989 = vmatprep.subr.bf16.mxu0 0
    %990 = vmatpush2.bf16.msra.mxu0 0
    %991 = vmatprep.subr.bf16.mxu0 0
    %992 = vmatpush2.bf16.msra.mxu0 0
    %993 = vmatprep.subr.bf16.mxu0 0
    %994 = vmatpush2.bf16.msra.mxu0 0
    %995 = vmatprep.subr.bf16.mxu0 0
    %996 = vmatpush2.bf16.msra.mxu0 0
    %997 = vmatprep.subr.bf16.mxu0 0
    %998 = vmatpush2.bf16.msra.mxu0 0
    %999 = vmatprep.subr.bf16.mxu0 0
    %1000 = vmatpush2.bf16.msra.mxu0 0
    %1001 = vmatprep.subr.bf16.mxu0 0
    %1002 = vmatpush2.bf16.msra.mxu0 0
    %1003 = vmatprep.subr.bf16.mxu0 0
    %1004 = vmatpush2.bf16.msra.mxu0 0
    %1005 = vmatprep.mubr.bf16.mxu0 0
    %1006 = vmatmul.mubr.bf16.gmra.mxu0 %v864
    %v1007 = vpop.f32.mrf.mxu0
    %v1008 = vadd.f32 %v886, %v1007
    %v1009 = vpop.f32.mrf.mxu0
    %v1010 = vadd.f32 %v890, %v1009
    %v1011 = vpop.f32.mrf.mxu0
    %v1012 = vpop.f32.mrf.mxu0
    %1013 = vdwg.mxu0
    %v1016 = vcombine.low %v1008, %v1010
    %v1017 = vcombine.high %v1008, %v1010
    %v1019 = vunpack.c.l.s4 1983009808
    %v1020 = vunpack.c.0.s8 %v1019
    %v1021 = vlaneseq
    %v1022 = vshrl.u32 %v1021, 7
    %v1023 = vsub.s32 %v1020, %v1022
    %v1024 = vrot.slane %v1016, %v1023
    %v1026 = vunpack.c.l.s4 1983009808
    %v1027 = vunpack.c.0.s8 %v1026
    %v1028 = vlaneseq
    %v1029 = vshrl.u32 %v1028, 7
    %v1030 = vsub.s32 %v1027, %v1029
    %v1031 = vrot.slane %v1017, %v1030
    %v1032 = vcombine.high %v1024, %v1024
    %v1033 = vcombine.high %v1031, %v1031
    %1038 = vst [vmem:[#allocation9] sm:$0xf] %v1024
    %1039 = vst [vmem:[#allocation9 + $0x4] sm:$0xf] %v1032
    %1040 = vst [vmem:[#allocation9 + $0x8] sm:$0xf] %v1031
    %1041 = vst [vmem:[#allocation9 + $0xc] sm:$0xf] %v1033
    %v1042 = vld [vmem:[%s1] sm:$0xff]
    %vm1043 = vcmask 261120
    %v1044 = vsel %vm1043, %v1042, 0.0
    %v1045 = vmul.f32 %v1010, 0.5
    %v1046 = vmul.f32 %v1045, 1.442695
    %v1047 = vpow.pop %v1046
    %v1048 = vmul.f32 %v1044, %v1047
    %v1049 = vadd.f32 %v1008, %v1048
    %v1050 = vpack.c.bf16 %v1049, %v1049
    %v1051 = vld [vmem:[#allocation5] sm:$0xf]
    %v1052 = vld [vmem:[#allocation5 + $0x4] sm:$0xf]
    %v1053 = vld [vmem:[#allocation5 + $0x8] sm:$0xf]
    %v1054 = vld [vmem:[#allocation5 + $0xc] sm:$0xf]
    %v1055 = vld [vmem:[#allocation5 + $0x10] sm:$0xf]
    %v1056 = vld [vmem:[#allocation5 + $0x14] sm:$0xf]
    %v1057 = vld [vmem:[#allocation5 + $0x18] sm:$0xf]
    %v1058 = vld [vmem:[#allocation5 + $0x1c] sm:$0xf]
    %v1059 = vld [vmem:[#allocation5 + $0x20] sm:$0xf]
    %v1060 = vld [vmem:[#allocation5 + $0x24] sm:$0xf]
    %v1061 = vld [vmem:[#allocation5 + $0x28] sm:$0xf]
    %v1062 = vld [vmem:[#allocation5 + $0x2c] sm:$0xf]
    %v1063 = vld [vmem:[#allocation5 + $0x30] sm:$0xf]
    %v1064 = vld [vmem:[#allocation5 + $0x34] sm:$0xf]
    %v1065 = vld [vmem:[#allocation5 + $0x38] sm:$0xf]
    %v1066 = vld [vmem:[#allocation5 + $0x3c] sm:$0xf]
    %v1067 = vld [vmem:[%s7] sm:$0x1]
    %v1069 = vlaneseq
    %v1070 = vshrl.u32 %v1069, 7
    %v1071 = vsub.s32 0, %v1070
    %v1072 = vrot.slane %v1067, %v1071
    %v1090 = vunpack.c.l.b16 %v1051
    %v1091 = vunpack.c.l.b16 %v1052
    %v1092 = vunpack.c.l.b16 %v1053
    %v1093 = vunpack.c.l.b16 %v1054
    %v1094 = vunpack.c.l.b16 %v1055
    %v1095 = vunpack.c.l.b16 %v1056
    %v1096 = vunpack.c.l.b16 %v1057
    %v1097 = vunpack.c.l.b16 %v1058
    %v1098 = vunpack.c.l.b16 %v1059
    %v1099 = vunpack.c.l.b16 %v1060
    %v1100 = vunpack.c.l.b16 %v1061
    %v1101 = vunpack.c.l.b16 %v1062
    %v1102 = vunpack.c.l.b16 %v1063
    %v1103 = vunpack.c.l.b16 %v1064
    %v1104 = vunpack.c.l.b16 %v1065
    %v1105 = vunpack.c.l.b16 %v1066
    %v1106 = vpack.c.b16 %v1091, %v1090
    %v1107 = vpack.c.b16 %v1093, %v1092
    %v1108 = vpack.c.b16 %v1095, %v1094
    %v1109 = vpack.c.b16 %v1097, %v1096
    %v1110 = vpack.c.b16 %v1099, %v1098
    %v1111 = vpack.c.b16 %v1101, %v1100
    %v1112 = vpack.c.b16 %v1103, %v1102
    %v1113 = vpack.c.b16 %v1105, %v1104
    %1122 = vmatprep.subr.bf16.mxu0 0
    %1123 = vmatpush1.bf16.msra.mxu0 %v1113
    %1124 = vmatprep.subr.bf16.mxu0 0
    %1125 = vmatpush1.bf16.msra.mxu0 %v1112
    %1126 = vmatprep.subr.bf16.mxu0 0
    %1127 = vmatpush1.bf16.msra.mxu0 %v1111
    %1128 = vmatprep.subr.bf16.mxu0 0
    %1129 = vmatpush1.bf16.msra.mxu0 %v1110
    %1130 = vmatprep.subr.bf16.mxu0 0
    %1131 = vmatpush1.bf16.msra.mxu0 %v1109
    %1132 = vmatprep.subr.bf16.mxu0 0
    %1133 = vmatpush1.bf16.msra.mxu0 %v1108
    %1134 = vmatprep.subr.bf16.mxu0 0
    %1135 = vmatpush1.bf16.msra.mxu0 %v1107
    %1136 = vmatprep.subr.bf16.mxu0 0
    %1137 = vmatpush1.bf16.msra.mxu0 %v1106
    %1138 = vmatprep.subr.bf16.mxu0 0
    %1139 = vmatpush2.bf16.msra.mxu0 0
    %1140 = vmatprep.subr.bf16.mxu0 0
    %1141 = vmatpush2.bf16.msra.mxu0 0
    %1142 = vmatprep.subr.bf16.mxu0 0
    %1143 = vmatpush2.bf16.msra.mxu0 0
    %1144 = vmatprep.subr.bf16.mxu0 0
    %1145 = vmatpush2.bf16.msra.mxu0 0
    %1146 = vmatprep.subr.bf16.mxu0 0
    %1147 = vmatpush2.bf16.msra.mxu0 0
    %1148 = vmatprep.subr.bf16.mxu0 0
    %1149 = vmatpush2.bf16.msra.mxu0 0
    %1150 = vmatprep.subr.bf16.mxu0 0
    %1151 = vmatpush2.bf16.msra.mxu0 0
    %1152 = vmatprep.subr.bf16.mxu0 0
    %1153 = vmatpush2.bf16.msra.mxu0 0
    %1154 = vmatprep.mubr.bf16.mxu0 0
    %1155 = vmatmul.mubr.bf16.gmra.mxu0 %v1050
    %v1156 = vpop.f32.mrf.mxu0
    %v1157 = vadd.f32 %v1072, %v1156
    %v1158 = vpop.f32.mrf.mxu0
    %v1159 = vpop.f32.mrf.mxu0
    %v1160 = vpop.f32.mrf.mxu0
    %1161 = vdwg.mxu0
    %v1162 = vmax.f32 %v1157, 0.0
    %v1163 = vpack.c.bf16 %v1162, %v1162
    %v1164 = vld [vmem:[#allocation7] sm:$0xff]
    %v1165 = vld [vmem:[#allocation7 + $0x8] sm:$0xff]
    %v1166 = vld [vmem:[#allocation7 + $0x10] sm:$0xff]
    %v1167 = vld [vmem:[#allocation7 + $0x18] sm:$0xff]
    %v1168 = vld [vmem:[#allocation7 + $0x20] sm:$0xff]
    %v1169 = vld [vmem:[#allocation7 + $0x28] sm:$0xff]
    %v1170 = vld [vmem:[#allocation7 + $0x30] sm:$0xff]
    %v1171 = vld [vmem:[#allocation7 + $0x38] sm:$0xff]
    %v1172 = vld [vmem:[#allocation7 + $0x40] sm:$0xff]
    %v1173 = vld [vmem:[#allocation7 + $0x48] sm:$0xff]
    %v1174 = vld [vmem:[#allocation7 + $0x50] sm:$0xff]
    %v1175 = vld [vmem:[#allocation7 + $0x58] sm:$0xff]
    %v1176 = vld [vmem:[#allocation7 + $0x60] sm:$0xff]
    %v1177 = vld [vmem:[#allocation7 + $0x68] sm:$0xff]
    %v1178 = vld [vmem:[#allocation7 + $0x70] sm:$0xff]
    %v1179 = vld [vmem:[#allocation7 + $0x78] sm:$0xff]
    %v1180 = vld [vmem:[#allocation7 + $0x80] sm:$0xff]
    %v1181 = vld [vmem:[#allocation7 + $0x88] sm:$0xff]
    %v1182 = vld [vmem:[#allocation7 + $0x90] sm:$0xff]
    %v1183 = vld [vmem:[#allocation7 + $0x98] sm:$0xff]
    %v1184 = vld [vmem:[#allocation7 + $0xa0] sm:$0xff]
    %v1185 = vld [vmem:[#allocation7 + $0xa8] sm:$0xff]
    %v1186 = vld [vmem:[#allocation7 + $0xb0] sm:$0xff]
    %v1187 = vld [vmem:[#allocation7 + $0xb8] sm:$0xff]
    %v1188 = vld [vmem:[#allocation7 + $0xc0] sm:$0xff]
    %v1189 = vld [vmem:[#allocation7 + $0xc8] sm:$0xff]
    %v1190 = vld [vmem:[#allocation7 + $0xd0] sm:$0xff]
    %v1191 = vld [vmem:[#allocation7 + $0xd8] sm:$0xff]
    %v1192 = vld [vmem:[#allocation7 + $0xe0] sm:$0xff]
    %v1193 = vld [vmem:[#allocation7 + $0xe8] sm:$0xff]
    %v1194 = vld [vmem:[#allocation7 + $0xf0] sm:$0xff]
    %v1195 = vld [vmem:[#allocation7 + $0xf8] sm:$0xff]
    %v1196 = vld [vmem:[#allocation7 + $0x100] sm:$0xff]
    %v1197 = vld [vmem:[#allocation7 + $0x108] sm:$0xff]
    %v1198 = vld [vmem:[#allocation7 + $0x110] sm:$0xff]
    %v1199 = vld [vmem:[#allocation7 + $0x118] sm:$0xff]
    %v1200 = vld [vmem:[#allocation7 + $0x120] sm:$0xff]
    %v1201 = vld [vmem:[#allocation7 + $0x128] sm:$0xff]
    %v1202 = vld [vmem:[#allocation7 + $0x130] sm:$0xff]
    %v1203 = vld [vmem:[#allocation7 + $0x138] sm:$0xff]
    %v1204 = vld [vmem:[#allocation7 + $0x140] sm:$0xff]
    %v1205 = vld [vmem:[#allocation7 + $0x148] sm:$0xff]
    %v1206 = vld [vmem:[#allocation7 + $0x150] sm:$0xff]
    %v1207 = vld [vmem:[#allocation7 + $0x158] sm:$0xff]
    %v1208 = vld [vmem:[#allocation7 + $0x160] sm:$0xff]
    %v1209 = vld [vmem:[#allocation7 + $0x168] sm:$0xff]
    %v1210 = vld [vmem:[#allocation7 + $0x170] sm:$0xff]
    %v1211 = vld [vmem:[#allocation7 + $0x178] sm:$0xff]
    %v1212 = vld [vmem:[#allocation7 + $0x180] sm:$0xff]
    %v1213 = vld [vmem:[#allocation7 + $0x188] sm:$0xff]
    %v1214 = vld [vmem:[#allocation7 + $0x190] sm:$0xff]
    %v1215 = vld [vmem:[#allocation7 + $0x198] sm:$0xff]
    %v1216 = vld [vmem:[#allocation7 + $0x1a0] sm:$0xff]
    %v1217 = vld [vmem:[#allocation7 + $0x1a8] sm:$0xff]
    %v1218 = vld [vmem:[#allocation7 + $0x1b0] sm:$0xff]
    %v1219 = vld [vmem:[#allocation7 + $0x1b8] sm:$0xff]
    %v1220 = vld [vmem:[#allocation7 + $0x1c0] sm:$0xff]
    %v1221 = vld [vmem:[#allocation7 + $0x1c8] sm:$0xff]
    %v1222 = vld [vmem:[#allocation7 + $0x1d0] sm:$0xff]
    %v1223 = vld [vmem:[#allocation7 + $0x1d8] sm:$0xff]
    %v1224 = vld [vmem:[#allocation7 + $0x1e0] sm:$0xff]
    %v1225 = vld [vmem:[#allocation7 + $0x1e8] sm:$0xff]
    %v1226 = vld [vmem:[#allocation7 + $0x1f0] sm:$0xff]
    %v1227 = vld [vmem:[#allocation7 + $0x1f8] sm:$0xff]
    %v1228 = vld [vmem:[%s9] sm:$0xff]
    %v1230 = vlaneseq
    %v1231 = vshrl.u32 %v1230, 7
    %v1232 = vsub.s32 0, %v1231
    %v1233 = vrot.slane %v1228, %v1232
    %v1234 = vlaneseq
    %v1235 = vshrl.u32 %v1234, 7
    %v1236 = vsub.s32 1, %v1235
    %v1237 = vrot.slane %v1228, %v1236
    %v1238 = vlaneseq
    %v1239 = vshrl.u32 %v1238, 7
    %v1240 = vsub.s32 2, %v1239
    %v1241 = vrot.slane %v1228, %v1240
    %v1242 = vlaneseq
    %v1243 = vshrl.u32 %v1242, 7
    %v1244 = vsub.s32 3, %v1243
    %v1245 = vrot.slane %v1228, %v1244
    %v1246 = vlaneseq
    %v1247 = vshrl.u32 %v1246, 7
    %v1248 = vsub.s32 4, %v1247
    %v1249 = vrot.slane %v1228, %v1248
    %v1250 = vlaneseq
    %v1251 = vshrl.u32 %v1250, 7
    %v1252 = vsub.s32 5, %v1251
    %v1253 = vrot.slane %v1228, %v1252
    %v1254 = vlaneseq
    %v1255 = vshrl.u32 %v1254, 7
    %v1256 = vsub.s32 6, %v1255
    %v1257 = vrot.slane %v1228, %v1256
    %v1258 = vlaneseq
    %v1259 = vshrl.u32 %v1258, 7
    %v1260 = vsub.s32 7, %v1259
    %v1261 = vrot.slane %v1228, %v1260
    %v1334 = vunpack.c.l.b16 %v1164
    %v1335 = vunpack.c.h.b16 %v1164
    %v1336 = vunpack.c.l.b16 %v1165
    %v1337 = vunpack.c.h.b16 %v1165
    %v1338 = vunpack.c.l.b16 %v1166
    %v1339 = vunpack.c.h.b16 %v1166
    %v1340 = vunpack.c.l.b16 %v1167
    %v1341 = vunpack.c.h.b16 %v1167
    %v1342 = vunpack.c.l.b16 %v1168
    %v1343 = vunpack.c.h.b16 %v1168
    %v1344 = vunpack.c.l.b16 %v1169
    %v1345 = vunpack.c.h.b16 %v1169
    %v1346 = vunpack.c.l.b16 %v1170
    %v1347 = vunpack.c.h.b16 %v1170
    %v1348 = vunpack.c.l.b16 %v1171
    %v1349 = vunpack.c.h.b16 %v1171
    %v1350 = vunpack.c.l.b16 %v1172
    %v1351 = vunpack.c.h.b16 %v1172
    %v1352 = vunpack.c.l.b16 %v1173
    %v1353 = vunpack.c.h.b16 %v1173
    %v1354 = vunpack.c.l.b16 %v1174
    %v1355 = vunpack.c.h.b16 %v1174
    %v1356 = vunpack.c.l.b16 %v1175
    %v1357 = vunpack.c.h.b16 %v1175
    %v1358 = vunpack.c.l.b16 %v1176
    %v1359 = vunpack.c.h.b16 %v1176
    %v1360 = vunpack.c.l.b16 %v1177
    %v1361 = vunpack.c.h.b16 %v1177
    %v1362 = vunpack.c.l.b16 %v1178
    %v1363 = vunpack.c.h.b16 %v1178
    %v1364 = vunpack.c.l.b16 %v1179
    %v1365 = vunpack.c.h.b16 %v1179
    %v1366 = vunpack.c.l.b16 %v1180
    %v1367 = vunpack.c.h.b16 %v1180
    %v1368 = vunpack.c.l.b16 %v1181
    %v1369 = vunpack.c.h.b16 %v1181
    %v1370 = vunpack.c.l.b16 %v1182
    %v1371 = vunpack.c.h.b16 %v1182
    %v1372 = vunpack.c.l.b16 %v1183
    %v1373 = vunpack.c.h.b16 %v1183
    %v1374 = vunpack.c.l.b16 %v1184
    %v1375 = vunpack.c.h.b16 %v1184
    %v1376 = vunpack.c.l.b16 %v1185
    %v1377 = vunpack.c.h.b16 %v1185
    %v1378 = vunpack.c.l.b16 %v1186
    %v1379 = vunpack.c.h.b16 %v1186
    %v1380 = vunpack.c.l.b16 %v1187
    %v1381 = vunpack.c.h.b16 %v1187
    %v1382 = vunpack.c.l.b16 %v1188
    %v1383 = vunpack.c.h.b16 %v1188
    %v1384 = vunpack.c.l.b16 %v1189
    %v1385 = vunpack.c.h.b16 %v1189
    %v1386 = vunpack.c.l.b16 %v1190
    %v1387 = vunpack.c.h.b16 %v1190
    %v1388 = vunpack.c.l.b16 %v1191
    %v1389 = vunpack.c.h.b16 %v1191
    %v1390 = vunpack.c.l.b16 %v1192
    %v1391 = vunpack.c.h.b16 %v1192
    %v1392 = vunpack.c.l.b16 %v1193
    %v1393 = vunpack.c.h.b16 %v1193
    %v1394 = vunpack.c.l.b16 %v1194
    %v1395 = vunpack.c.h.b16 %v1194
    %v1396 = vunpack.c.l.b16 %v1195
    %v1397 = vunpack.c.h.b16 %v1195
    %v1398 = vunpack.c.l.b16 %v1196
    %v1399 = vunpack.c.h.b16 %v1196
    %v1400 = vunpack.c.l.b16 %v1197
    %v1401 = vunpack.c.h.b16 %v1197
    %v1402 = vunpack.c.l.b16 %v1198
    %v1403 = vunpack.c.h.b16 %v1198
    %v1404 = vunpack.c.l.b16 %v1199
    %v1405 = vunpack.c.h.b16 %v1199
    %v1406 = vunpack.c.l.b16 %v1200
    %v1407 = vunpack.c.h.b16 %v1200
    %v1408 = vunpack.c.l.b16 %v1201
    %v1409 = vunpack.c.h.b16 %v1201
    %v1410 = vunpack.c.l.b16 %v1202
    %v1411 = vunpack.c.h.b16 %v1202
    %v1412 = vunpack.c.l.b16 %v1203
    %v1413 = vunpack.c.h.b16 %v1203
    %v1414 = vunpack.c.l.b16 %v1204
    %v1415 = vunpack.c.h.b16 %v1204
    %v1416 = vunpack.c.l.b16 %v1205
    %v1417 = vunpack.c.h.b16 %v1205
    %v1418 = vunpack.c.l.b16 %v1206
    %v1419 = vunpack.c.h.b16 %v1206
    %v1420 = vunpack.c.l.b16 %v1207
    %v1421 = vunpack.c.h.b16 %v1207
    %v1422 = vunpack.c.l.b16 %v1208
    %v1423 = vunpack.c.h.b16 %v1208
    %v1424 = vunpack.c.l.b16 %v1209
    %v1425 = vunpack.c.h.b16 %v1209
    %v1426 = vunpack.c.l.b16 %v1210
    %v1427 = vunpack.c.h.b16 %v1210
    %v1428 = vunpack.c.l.b16 %v1211
    %v1429 = vunpack.c.h.b16 %v1211
    %v1430 = vunpack.c.l.b16 %v1212
    %v1431 = vunpack.c.h.b16 %v1212
    %v1432 = vunpack.c.l.b16 %v1213
    %v1433 = vunpack.c.h.b16 %v1213
    %v1434 = vunpack.c.l.b16 %v1214
    %v1435 = vunpack.c.h.b16 %v1214
    %v1436 = vunpack.c.l.b16 %v1215
    %v1437 = vunpack.c.h.b16 %v1215
    %v1438 = vunpack.c.l.b16 %v1216
    %v1439 = vunpack.c.h.b16 %v1216
    %v1440 = vunpack.c.l.b16 %v1217
    %v1441 = vunpack.c.h.b16 %v1217
    %v1442 = vunpack.c.l.b16 %v1218
    %v1443 = vunpack.c.h.b16 %v1218
    %v1444 = vunpack.c.l.b16 %v1219
    %v1445 = vunpack.c.h.b16 %v1219
    %v1446 = vunpack.c.l.b16 %v1220
    %v1447 = vunpack.c.h.b16 %v1220
    %v1448 = vunpack.c.l.b16 %v1221
    %v1449 = vunpack.c.h.b16 %v1221
    %v1450 = vunpack.c.l.b16 %v1222
    %v1451 = vunpack.c.h.b16 %v1222
    %v1452 = vunpack.c.l.b16 %v1223
    %v1453 = vunpack.c.h.b16 %v1223
    %v1454 = vunpack.c.l.b16 %v1224
    %v1455 = vunpack.c.h.b16 %v1224
    %v1456 = vunpack.c.l.b16 %v1225
    %v1457 = vunpack.c.h.b16 %v1225
    %v1458 = vunpack.c.l.b16 %v1226
    %v1459 = vunpack.c.h.b16 %v1226
    %v1460 = vunpack.c.l.b16 %v1227
    %v1461 = vunpack.c.h.b16 %v1227
    %v1462 = vpack.c.b16 %v1342, %v1334
    %v1463 = vpack.c.b16 %v1343, %v1335
    %v1464 = vpack.c.b16 %v1344, %v1336
    %v1465 = vpack.c.b16 %v1345, %v1337
    %v1466 = vpack.c.b16 %v1346, %v1338
    %v1467 = vpack.c.b16 %v1347, %v1339
    %v1468 = vpack.c.b16 %v1348, %v1340
    %v1469 = vpack.c.b16 %v1349, %v1341
    %v1470 = vpack.c.b16 %v1358, %v1350
    %v1471 = vpack.c.b16 %v1359, %v1351
    %v1472 = vpack.c.b16 %v1360, %v1352
    %v1473 = vpack.c.b16 %v1361, %v1353
    %v1474 = vpack.c.b16 %v1362, %v1354
    %v1475 = vpack.c.b16 %v1363, %v1355
    %v1476 = vpack.c.b16 %v1364, %v1356
    %v1477 = vpack.c.b16 %v1365, %v1357
    %v1478 = vpack.c.b16 %v1374, %v1366
    %v1479 = vpack.c.b16 %v1375, %v1367
    %v1480 = vpack.c.b16 %v1376, %v1368
    %v1481 = vpack.c.b16 %v1377, %v1369
    %v1482 = vpack.c.b16 %v1378, %v1370
    %v1483 = vpack.c.b16 %v1379, %v1371
    %v1484 = vpack.c.b16 %v1380, %v1372
    %v1485 = vpack.c.b16 %v1381, %v1373
    %v1486 = vpack.c.b16 %v1390, %v1382
    %v1487 = vpack.c.b16 %v1391, %v1383
    %v1488 = vpack.c.b16 %v1392, %v1384
    %v1489 = vpack.c.b16 %v1393, %v1385
    %v1490 = vpack.c.b16 %v1394, %v1386
    %v1491 = vpack.c.b16 %v1395, %v1387
    %v1492 = vpack.c.b16 %v1396, %v1388
    %v1493 = vpack.c.b16 %v1397, %v1389
    %v1494 = vpack.c.b16 %v1406, %v1398
    %v1495 = vpack.c.b16 %v1407, %v1399
    %v1496 = vpack.c.b16 %v1408, %v1400
    %v1497 = vpack.c.b16 %v1409, %v1401
    %v1498 = vpack.c.b16 %v1410, %v1402
    %v1499 = vpack.c.b16 %v1411, %v1403
    %v1500 = vpack.c.b16 %v1412, %v1404
    %v1501 = vpack.c.b16 %v1413, %v1405
    %v1502 = vpack.c.b16 %v1422, %v1414
    %v1503 = vpack.c.b16 %v1423, %v1415
    %v1504 = vpack.c.b16 %v1424, %v1416
    %v1505 = vpack.c.b16 %v1425, %v1417
    %v1506 = vpack.c.b16 %v1426, %v1418
    %v1507 = vpack.c.b16 %v1427, %v1419
    %v1508 = vpack.c.b16 %v1428, %v1420
    %v1509 = vpack.c.b16 %v1429, %v1421
    %v1510 = vpack.c.b16 %v1438, %v1430
    %v1511 = vpack.c.b16 %v1439, %v1431
    %v1512 = vpack.c.b16 %v1440, %v1432
    %v1513 = vpack.c.b16 %v1441, %v1433
    %v1514 = vpack.c.b16 %v1442, %v1434
    %v1515 = vpack.c.b16 %v1443, %v1435
    %v1516 = vpack.c.b16 %v1444, %v1436
    %v1517 = vpack.c.b16 %v1445, %v1437
    %v1518 = vpack.c.b16 %v1454, %v1446
    %v1519 = vpack.c.b16 %v1455, %v1447
    %v1520 = vpack.c.b16 %v1456, %v1448
    %v1521 = vpack.c.b16 %v1457, %v1449
    %v1522 = vpack.c.b16 %v1458, %v1450
    %v1523 = vpack.c.b16 %v1459, %v1451
    %v1524 = vpack.c.b16 %v1460, %v1452
    %v1525 = vpack.c.b16 %v1461, %v1453
    %1590 = vmatprep.subr.bf16.mxu0 %v1519
    %1591 = vmatpush1.bf16.msra.mxu0 %v1518
    %1592 = vmatprep.subr.bf16.mxu0 %v1511
    %1593 = vmatpush1.bf16.msra.mxu0 %v1510
    %1594 = vmatprep.subr.bf16.mxu0 %v1503
    %1595 = vmatpush1.bf16.msra.mxu0 %v1502
    %1596 = vmatprep.subr.bf16.mxu0 %v1495
    %1597 = vmatpush1.bf16.msra.mxu0 %v1494
    %1598 = vmatprep.subr.bf16.mxu0 %v1487
    %1599 = vmatpush1.bf16.msra.mxu0 %v1486
    %1600 = vmatprep.subr.bf16.mxu0 %v1479
    %1601 = vmatpush1.bf16.msra.mxu0 %v1478
    %1602 = vmatprep.subr.bf16.mxu0 %v1471
    %1603 = vmatpush1.bf16.msra.mxu0 %v1470
    %1604 = vmatprep.subr.bf16.mxu0 %v1463
    %1605 = vmatpush1.bf16.msra.mxu0 %v1462
    %1606 = vmatprep.subr.bf16.mxu0 0
    %1607 = vmatpush2.bf16.msra.mxu0 0
    %1608 = vmatprep.subr.bf16.mxu0 0
    %1609 = vmatpush2.bf16.msra.mxu0 0
    %1610 = vmatprep.subr.bf16.mxu0 0
    %1611 = vmatpush2.bf16.msra.mxu0 0
    %1612 = vmatprep.subr.bf16.mxu0 0
    %1613 = vmatpush2.bf16.msra.mxu0 0
    %1614 = vmatprep.subr.bf16.mxu0 0
    %1615 = vmatpush2.bf16.msra.mxu0 0
    %1616 = vmatprep.subr.bf16.mxu0 0
    %1617 = vmatpush2.bf16.msra.mxu0 0
    %1618 = vmatprep.subr.bf16.mxu0 0
    %1619 = vmatpush2.bf16.msra.mxu0 0
    %1620 = vmatprep.subr.bf16.mxu0 0
    %1621 = vmatpush2.bf16.msra.mxu0 0
    %1622 = vmatprep.mubr.bf16.mxu0 0
    %1623 = vmatmul.mubr.bf16.gmra.mxu0 %v1163
    %v1624 = vpop.f32.mrf.mxu0
    %v1625 = vadd.f32 %v1233, %v1624
    %v1626 = vpop.f32.mrf.mxu0
    %v1627 = vadd.f32 %v1237, %v1626
    %v1628 = vpop.f32.mrf.mxu0
    %v1629 = vpop.f32.mrf.mxu0
    %1630 = vdwg.mxu0
    %1631 = vmatprep.subr.bf16.mxu0 %v1521
    %1632 = vmatpush1.bf16.msra.mxu0 %v1520
    %1633 = vmatprep.subr.bf16.mxu0 %v1513
    %1634 = vmatpush1.bf16.msra.mxu0 %v1512
    %1635 = vmatprep.subr.bf16.mxu0 %v1505
    %1636 = vmatpush1.bf16.msra.mxu0 %v1504
    %1637 = vmatprep.subr.bf16.mxu0 %v1497
    %1638 = vmatpush1.bf16.msra.mxu0 %v1496
    %1639 = vmatprep.subr.bf16.mxu0 %v1489
    %1640 = vmatpush1.bf16.msra.mxu0 %v1488
    %1641 = vmatprep.subr.bf16.mxu0 %v1481
    %1642 = vmatpush1.bf16.msra.mxu0 %v1480
    %1643 = vmatprep.subr.bf16.mxu0 %v1473
    %1644 = vmatpush1.bf16.msra.mxu0 %v1472
    %1645 = vmatprep.subr.bf16.mxu0 %v1465
    %1646 = vmatpush1.bf16.msra.mxu0 %v1464
    %1647 = vmatprep.subr.bf16.mxu0 0
    %1648 = vmatpush2.bf16.msra.mxu0 0
    %1649 = vmatprep.subr.bf16.mxu0 0
    %1650 = vmatpush2.bf16.msra.mxu0 0
    %1651 = vmatprep.subr.bf16.mxu0 0
    %1652 = vmatpush2.bf16.msra.mxu0 0
    %1653 = vmatprep.subr.bf16.mxu0 0
    %1654 = vmatpush2.bf16.msra.mxu0 0
    %1655 = vmatprep.subr.bf16.mxu0 0
    %1656 = vmatpush2.bf16.msra.mxu0 0
    %1657 = vmatprep.subr.bf16.mxu0 0
    %1658 = vmatpush2.bf16.msra.mxu0 0
    %1659 = vmatprep.subr.bf16.mxu0 0
    %1660 = vmatpush2.bf16.msra.mxu0 0
    %1661 = vmatprep.subr.bf16.mxu0 0
    %1662 = vmatpush2.bf16.msra.mxu0 0
    %1663 = vmatprep.mubr.bf16.mxu0 0
    %1664 = vmatmul.mubr.bf16.gmra.mxu0 %v1163
    %v1665 = vpop.f32.mrf.mxu0
    %v1666 = vadd.f32 %v1241, %v1665
    %v1667 = vpop.f32.mrf.mxu0
    %v1668 = vadd.f32 %v1245, %v1667
    %v1669 = vpop.f32.mrf.mxu0
    %v1670 = vpop.f32.mrf.mxu0
    %1671 = vdwg.mxu0
    %1672 = vmatprep.subr.bf16.mxu0 %v1523
    %1673 = vmatpush1.bf16.msra.mxu0 %v1522
    %1674 = vmatprep.subr.bf16.mxu0 %v1515
    %1675 = vmatpush1.bf16.msra.mxu0 %v1514
    %1676 = vmatprep.subr.bf16.mxu0 %v1507
    %1677 = vmatpush1.bf16.msra.mxu0 %v1506
    %1678 = vmatprep.subr.bf16.mxu0 %v1499
    %1679 = vmatpush1.bf16.msra.mxu0 %v1498
    %1680 = vmatprep.subr.bf16.mxu0 %v1491
    %1681 = vmatpush1.bf16.msra.mxu0 %v1490
    %1682 = vmatprep.subr.bf16.mxu0 %v1483
    %1683 = vmatpush1.bf16.msra.mxu0 %v1482
    %1684 = vmatprep.subr.bf16.mxu0 %v1475
    %1685 = vmatpush1.bf16.msra.mxu0 %v1474
    %1686 = vmatprep.subr.bf16.mxu0 %v1467
    %1687 = vmatpush1.bf16.msra.mxu0 %v1466
    %1688 = vmatprep.subr.bf16.mxu0 0
    %1689 = vmatpush2.bf16.msra.mxu0 0
    %1690 = vmatprep.subr.bf16.mxu0 0
    %1691 = vmatpush2.bf16.msra.mxu0 0
    %1692 = vmatprep.subr.bf16.mxu0 0
    %1693 = vmatpush2.bf16.msra.mxu0 0
    %1694 = vmatprep.subr.bf16.mxu0 0
    %1695 = vmatpush2.bf16.msra.mxu0 0
    %1696 = vmatprep.subr.bf16.mxu0 0
    %1697 = vmatpush2.bf16.msra.mxu0 0
    %1698 = vmatprep.subr.bf16.mxu0 0
    %1699 = vmatpush2.bf16.msra.mxu0 0
    %1700 = vmatprep.subr.bf16.mxu0 0
    %1701 = vmatpush2.bf16.msra.mxu0 0
    %1702 = vmatprep.subr.bf16.mxu0 0
    %1703 = vmatpush2.bf16.msra.mxu0 0
    %1704 = vmatprep.mubr.bf16.mxu0 0
    %1705 = vmatmul.mubr.bf16.gmra.mxu0 %v1163
    %v1706 = vpop.f32.mrf.mxu0
    %v1707 = vadd.f32 %v1249, %v1706
    %v1708 = vpop.f32.mrf.mxu0
    %v1709 = vadd.f32 %v1253, %v1708
    %v1710 = vpop.f32.mrf.mxu0
    %v1711 = vpop.f32.mrf.mxu0
    %1712 = vdwg.mxu0
    %1713 = vmatprep.subr.bf16.mxu0 %v1525
    %1714 = vmatpush1.bf16.msra.mxu0 %v1524
    %1715 = vmatprep.subr.bf16.mxu0 %v1517
    %1716 = vmatpush1.bf16.msra.mxu0 %v1516
    %1717 = vmatprep.subr.bf16.mxu0 %v1509
    %1718 = vmatpush1.bf16.msra.mxu0 %v1508
    %1719 = vmatprep.subr.bf16.mxu0 %v1501
    %1720 = vmatpush1.bf16.msra.mxu0 %v1500
    %1721 = vmatprep.subr.bf16.mxu0 %v1493
    %1722 = vmatpush1.bf16.msra.mxu0 %v1492
    %1723 = vmatprep.subr.bf16.mxu0 %v1485
    %1724 = vmatpush1.bf16.msra.mxu0 %v1484
    %1725 = vmatprep.subr.bf16.mxu0 %v1477
    %1726 = vmatpush1.bf16.msra.mxu0 %v1476
    %1727 = vmatprep.subr.bf16.mxu0 %v1469
    %1728 = vmatpush1.bf16.msra.mxu0 %v1468
    %1729 = vmatprep.subr.bf16.mxu0 0
    %1730 = vmatpush2.bf16.msra.mxu0 0
    %1731 = vmatprep.subr.bf16.mxu0 0
    %1732 = vmatpush2.bf16.msra.mxu0 0
    %1733 = vmatprep.subr.bf16.mxu0 0
    %1734 = vmatpush2.bf16.msra.mxu0 0
    %1735 = vmatprep.subr.bf16.mxu0 0
    %1736 = vmatpush2.bf16.msra.mxu0 0
    %1737 = vmatprep.subr.bf16.mxu0 0
    %1738 = vmatpush2.bf16.msra.mxu0 0
    %1739 = vmatprep.subr.bf16.mxu0 0
    %1740 = vmatpush2.bf16.msra.mxu0 0
    %1741 = vmatprep.subr.bf16.mxu0 0
    %1742 = vmatpush2.bf16.msra.mxu0 0
    %1743 = vmatprep.subr.bf16.mxu0 0
    %1744 = vmatpush2.bf16.msra.mxu0 0
    %1745 = vmatprep.mubr.bf16.mxu0 0
    %1746 = vmatmul.mubr.bf16.gmra.mxu0 %v1163
    %v1747 = vpop.f32.mrf.mxu0
    %v1748 = vadd.f32 %v1257, %v1747
    %v1749 = vpop.f32.mrf.mxu0
    %v1750 = vadd.f32 %v1261, %v1749
    %v1751 = vpop.f32.mrf.mxu0
    %v1752 = vpop.f32.mrf.mxu0
    %1753 = vdwg.mxu0
    %v1754 = vxor.u32 %v1625, 2147483648
    %v1755 = vxor.u32 %v1627, 2147483648
    %v1756 = vxor.u32 %v1666, 2147483648
    %v1757 = vxor.u32 %v1668, 2147483648
    %v1758 = vxor.u32 %v1707, 2147483648
    %v1759 = vxor.u32 %v1709, 2147483648
    %v1760 = vxor.u32 %v1748, 2147483648
    %v1761 = vxor.u32 %v1750, 2147483648
    %v1762 = vmul.f32 %v1754, 1.442695
    %v1763 = vpow.pop %v1762
    %v1764 = vmul.f32 %v1755, 1.442695
    %v1765 = vpow.pop %v1764
    %v1766 = vmul.f32 %v1756, 1.442695
    %v1767 = vpow.pop %v1766
    %v1768 = vmul.f32 %v1757, 1.442695
    %v1769 = vpow.pop %v1768
    %v1770 = vmul.f32 %v1758, 1.442695
    %v1771 = vpow.pop %v1770
    %v1772 = vmul.f32 %v1759, 1.442695
    %v1773 = vpow.pop %v1772
    %v1774 = vmul.f32 %v1760, 1.442695
    %v1775 = vpow.pop %v1774
    %v1776 = vmul.f32 %v1761, 1.442695
    %v1777 = vpow.pop %v1776
    %v1778 = vadd.f32 %v1763, 1.0
    %v1779 = vadd.f32 %v1765, 1.0
    %v1780 = vadd.f32 %v1767, 1.0
    %v1781 = vadd.f32 %v1769, 1.0
    %v1782 = vadd.f32 %v1771, 1.0
    %v1783 = vadd.f32 %v1773, 1.0
    %v1784 = vadd.f32 %v1775, 1.0
    %v1785 = vadd.f32 %v1777, 1.0
    %v1786 = vrcp.pop %v1778
    %v1787 = vmul.f32 1.0, %v1786
    %v1788 = vrcp.pop %v1779
    %v1789 = vmul.f32 1.0, %v1788
    %v1790 = vrcp.pop %v1780
    %v1791 = vmul.f32 1.0, %v1790
    %v1792 = vrcp.pop %v1781
    %v1793 = vmul.f32 1.0, %v1792
    %v1794 = vrcp.pop %v1782
    %v1795 = vmul.f32 1.0, %v1794
    %v1796 = vrcp.pop %v1783
    %v1797 = vmul.f32 1.0, %v1796
    %v1798 = vrcp.pop %v1784
    %v1799 = vmul.f32 1.0, %v1798
    %v1800 = vrcp.pop %v1785
    %v1801 = vmul.f32 1.0, %v1800
    %v1802 = vpack.c.bf16 %v1787, %v1787
    %v1803 = vpack.c.bf16 %v1789, %v1789
    %v1804 = vpack.c.bf16 %v1791, %v1791
    %v1805 = vpack.c.bf16 %v1793, %v1793
    %v1806 = vpack.c.bf16 %v1795, %v1795
    %v1807 = vpack.c.bf16 %v1797, %v1797
    %v1808 = vpack.c.bf16 %v1799, %v1799
    %v1809 = vpack.c.bf16 %v1801, %v1801
    %v1818 = vcombine.low %v1802, %v1803
    %v1819 = vcombine.low %v1804, %v1805
    %v1820 = vcombine.low %v1806, %v1807
    %v1821 = vcombine.low %v1808, %v1809
    %v1823 = vunpack.c.l.s4 1966171168
    %v1824 = vunpack.c.0.s8 %v1823
    %v1825 = vlaneseq
    %v1826 = vshrl.u32 %v1825, 7
    %v1827 = vsub.s32 %v1824, %v1826
    %v1828 = vrot.slane %v1818, %v1827
    %v1830 = vunpack.c.l.s4 1966171168
    %v1831 = vunpack.c.0.s8 %v1830
    %v1832 = vlaneseq
    %v1833 = vshrl.u32 %v1832, 7
    %v1834 = vsub.s32 %v1831, %v1833
    %v1835 = vrot.slane %v1819, %v1834
    %v1837 = vunpack.c.l.s4 1966171168
    %v1838 = vunpack.c.0.s8 %v1837
    %v1839 = vlaneseq
    %v1840 = vshrl.u32 %v1839, 7
    %v1841 = vsub.s32 %v1838, %v1840
    %v1842 = vrot.slane %v1820, %v1841
    %v1844 = vunpack.c.l.s4 1966171168
    %v1845 = vunpack.c.0.s8 %v1844
    %v1846 = vlaneseq
    %v1847 = vshrl.u32 %v1846, 7
    %v1848 = vsub.s32 %v1845, %v1847
    %v1849 = vrot.slane %v1821, %v1848
    %v1850 = vcombine.low %v1828, %v1835
    %v1851 = vcombine.high %v1828, %v1835
    %v1852 = vcombine.low %v1842, %v1849
    %v1853 = vcombine.high %v1842, %v1849
    %v1855 = vunpack.c.l.s4 1966171168
    %v1856 = vunpack.c.0.s8 %v1855
    %v1857 = vlaneseq
    %v1858 = vshrl.u32 %v1857, 7
    %v1859 = vsub.s32 %v1856, %v1858
    %v1860 = vrot.slane %v1850, %v1859
    %v1862 = vunpack.c.l.s4 1966171168
    %v1863 = vunpack.c.0.s8 %v1862
    %v1864 = vlaneseq
    %v1865 = vshrl.u32 %v1864, 7
    %v1866 = vsub.s32 %v1863, %v1865
    %v1867 = vrot.slane %v1851, %v1866
    %v1869 = vunpack.c.l.s4 1966171168
    %v1870 = vunpack.c.0.s8 %v1869
    %v1871 = vlaneseq
    %v1872 = vshrl.u32 %v1871, 7
    %v1873 = vsub.s32 %v1870, %v1872
    %v1874 = vrot.slane %v1852, %v1873
    %v1876 = vunpack.c.l.s4 1966171168
    %v1877 = vunpack.c.0.s8 %v1876
    %v1878 = vlaneseq
    %v1879 = vshrl.u32 %v1878, 7
    %v1880 = vsub.s32 %v1877, %v1879
    %v1881 = vrot.slane %v1853, %v1880
    %v1882 = vcombine.low %v1860, %v1874
    %v1883 = vcombine.high %v1860, %v1874
    %v1884 = vcombine.low %v1867, %v1881
    %v1885 = vcombine.high %v1867, %v1881
    %1890 = vst [vmem:[#allocation8] sm:$0xff] %v1882
    %1891 = vst [vmem:[#allocation8 + $0x8] sm:$0xff] %v1884
    %1892 = vst [vmem:[#allocation8 + $0x10] sm:$0xff] %v1883
    %1893 = vst [vmem:[#allocation8 + $0x18] sm:$0xff] %v1885
    // Predicated region
    $region54: #{vae_forward.1} parent=1 // pred_check
      _
    $region55: #{vae_forward.1} parent=1 // pred_check_branch
      %1895 = sbr.rel (0) target = $region57
    $region56: #{vae_forward.1} parent=1 // pred_region
      %s1897 = ssub.s32 512, 128
      %1898 = vsyncadd [#allocation4], %s1897
      %s1899 = sshll.u32 [#allocation8], 4
      %s1900 = int_to_ptr.vmem [resolvable:$true] %s1899
      %1905 = dma.vmem_to_hbm [thread:$0]  %s1900, 128, %s10, [#allocation4], 128, 128, 8
    $region57: #{vae_forward.1} parent=1 // pred_fallthru
      _
    // Predicated region
    $region58: #{vae_forward.1} parent=1 // pred_check
      _
    $region59: #{vae_forward.1} parent=1 // pred_check_branch
      %1907 = sbr.rel (0) target = $region61
    $region60: #{vae_forward.1} parent=1 // pred_region
      // Predicated region
      $region62: #{vae_forward.1} parent=60 // pred_check
        _
      $region63: #{vae_forward.1} parent=60 // pred_check_branch
        %1909 = sbr.rel (0) target = $region65
      $region64: #{vae_forward.1} parent=60 // pred_region
        // Predicated region
        $region66: #{vae_forward.1} parent=64 // pred_check
          _
        $region67: #{vae_forward.1} parent=64 // pred_check_branch
          %1911 = sbr.rel target = $region69
        $region68: #{vae_forward.1} parent=64 // pred_region
          // Predicated region
          $region81: #{vae_forward.1} parent=68 // pred_check
            _
          $region82: #{vae_forward.1} parent=68 // pred_check_branch
            %1927 = sbr.rel (0) target = $region84
          $region83: #{vae_forward.1} parent=68 // pred_region
            %s1929 = ssub.s32 16, 1
            loop: start=0, step=1, limit=1
            $region85: #{vae_forward.1} parent=83 // loop_pre_header
              _
            $region86: #{vae_forward.1} parent=83 // loop_header
              %s1931 = sphi 0, %s1935
              %p1932 = scmp.ge.s32.totalorder %s1931, 1
              %s1936 = sphi [#allocation9], [#allocation9]
              %s1937 = sphi %s11, %s11
            $region87: #{vae_forward.1} parent=83 // loop_header_branch
              %1934 = sbr.rel (%p1932) target = $region91
            $region88: #{vae_forward.1} parent=83 // loop_body
              %v1938 = vld [vmem:[%s1936] sm:%s1929]
              %1939 = vst [vmem:[%s1937] sm:%s1929] %v1938
            $region89: #{vae_forward.1} parent=83 // loop_footer
              %s1935 = sadd.s32 1, %s1931
            $region90: #{vae_forward.1} parent=83 // loop_footer_branch
              %1930 = sbr.rel target = $region86
            $region91: #{vae_forward.1} parent=83 // loop_exit
              _
          $region84: #{vae_forward.1} parent=68 // pred_fallthru
            _
        $region69: #{vae_forward.1} parent=64 // pred_fallthru
          _
        // Predicated region
        $region70: #{vae_forward.1} parent=64 // pred_check
          _
        $region71: #{vae_forward.1} parent=64 // pred_check_branch
          %1913 = sbr.rel (0) target = $region73
        $region72: #{vae_forward.1} parent=64 // pred_region
          %s1915 = ssub.s32 16, 1
          loop: start=0, step=1, limit=1
          $region74: #{vae_forward.1} parent=72 // loop_pre_header
            _
          $region75: #{vae_forward.1} parent=72 // loop_header
            %s1917 = sphi 0, %s1921
            %p1918 = scmp.ge.s32.totalorder %s1917, 1
            %s1922 = sphi [#allocation9], [#allocation9]
            %s1923 = sphi %s11, %s11
          $region76: #{vae_forward.1} parent=72 // loop_header_branch
            %1920 = sbr.rel (%p1918) target = $region80
          $region77: #{vae_forward.1} parent=72 // loop_body
            %v1924 = vld [vmem:[%s1922] sm:%s1915]
            %1925 = vst [vmem:[%s1923] sm:%s1915] %v1924
          $region78: #{vae_forward.1} parent=72 // loop_footer
            %s1921 = sadd.s32 1, %s1917
          $region79: #{vae_forward.1} parent=72 // loop_footer_branch
            %1916 = sbr.rel target = $region75
          $region80: #{vae_forward.1} parent=72 // loop_exit
            _
        $region73: #{vae_forward.1} parent=64 // pred_fallthru
          _
      $region65: #{vae_forward.1} parent=60 // pred_fallthru
        _
      %1940 = vnop
    $region61: #{vae_forward.1} parent=1 // pred_fallthru
      _
    // Predicated region
    $region92: #{vae_forward.1} parent=1 // pred_check
      _
    $region93: #{vae_forward.1} parent=1 // pred_check_branch
      %1942 = sbr.rel (0) target = $region95
    $region94: #{vae_forward.1} parent=1 // pred_region
      %1943 = dma.done [#allocation4], 512
    $region95: #{vae_forward.1} parent=1 // pred_fallthru
      _
    // Predicated region
    $region96: #{vae_forward.1} parent=1 // pred_check
      _
    $region97: #{vae_forward.1} parent=1 // pred_check_branch
      %1945 = sbr.rel (0) target = $region99
    $region98: #{vae_forward.1} parent=1 // pred_region
      _
    $region99: #{vae_forward.1} parent=1 // pred_fallthru
      _
    %1946 = vsyncpa [#allocation3], 1
    %1947 = vsyncpa [#allocation6], 1
    %1948 = vsyncpa [#allocation4], 1

</llo_original>
